<compile_context>
chip_gen: v7x
topology: tpu7x:2x2x1
jax: 0.10.0
libtpu: 0.0.40
codegen_flags: <defaults>
</compile_context>

<pallas_src>
import functools

import jax
import jax.numpy as jnp
from jax import lax
from jax.experimental import pallas as pl
from jax.experimental.pallas import tpu as pltpu

_MIB = 1024 * 1024


def _cross_modal_attention_kernel(
    audio_ref,   # (1, S,  Din)  full key/value sequence for this batch element
    visual_ref,  # (1, TQ, Din)  query tile
    wq_ref,      # (Din, H)
    bq_ref,      # (1, H)
    wk_ref,      # (Din, H)
    bk_ref,      # (1, H)
    wv_ref,      # (Din, H)
    bv_ref,      # (1, H)
    wo_ref,      # (H, Dout)
    bo_ref,      # (1, Dout)
    out_ref,     # (1, TQ, Dout)
    k_sc,        # VMEM (S, H) compute dtype
    v_sc,        # VMEM (S, H) compute dtype
    *,
    cache_kv: bool,
):
    def project_kv():
        audio = audio_ref[0]                                     # (S, Din)
        k = jnp.dot(audio, wk_ref[...],
                    preferred_element_type=jnp.float32) + bk_ref[...]
        v = jnp.dot(audio, wv_ref[...],
                    preferred_element_type=jnp.float32) + bv_ref[...]
        k_sc[...] = k.astype(k_sc.dtype)
        v_sc[...] = v.astype(v_sc.dtype)

    if cache_kv:
        # q axis is "arbitrary": the scratch persists across query tiles, so
        # the (S, Din) x (Din, H) projections run once per batch element
        # (program_id(1) wraps back to 0 whenever b advances).
        pl.when(pl.program_id(1) == 0)(project_kv)
    else:
        # Single query tile per batch (or B == 1 keeping q parallel on v7x):
        # project K/V in-line every step.
        project_kv()

    visual = visual_ref[0]                                       # (TQ, Din)
    q = jnp.dot(visual, wq_ref[...],
                preferred_element_type=jnp.float32) + bq_ref[...]  # (TQ, H) f32

    # Attention scores (TQ, S): contract over H. Operands in the compute dtype
    # (bf16 stays bf16), accumulation in f32 on the MXU.
    k = k_sc[...]
    scores = lax.dot_general(
        q.astype(k.dtype), k,
        dimension_numbers=(((1,), (1,)), ((), ())),
        preferred_element_type=jnp.float32,
    )

    # Numerically-stable softmax; normalization deferred until after the PV
    # matmul (divide a (TQ, H) tile instead of the (TQ, S) matrix).
    m = jnp.max(scores, axis=-1, keepdims=True)
    e = jnp.exp(scores - m)                                      # (TQ, S) f32
    denom = jnp.sum(e, axis=-1, keepdims=True)                   # (TQ, 1)

    attended = jnp.dot(e.astype(v_sc.dtype), v_sc[...],
                       preferred_element_type=jnp.float32)       # (TQ, H) f32
    attended = attended * pl.reciprocal(denom, approx=False)     # exact

    out = jnp.dot(attended.astype(wo_ref.dtype), wo_ref[...],
                  preferred_element_type=jnp.float32) + bo_ref[...]
    out = out + visual.astype(jnp.float32)                       # residual
    out_ref[0] = out.astype(out_ref.dtype)


def _vmem_limit_bytes():
    """Generation-aware scoped-VMEM limit: physical capacity minus ~24 MiB of
    headroom for compiler-internal scratch, capped at 96 MiB.
    v5e/v6e (128 MiB physical) -> 96 MiB; v7x (64 MiB) -> 40 MiB."""
    cap = 64 * _MIB  # conservative default (v7x physical size)
    try:
        info = pltpu.get_tpu_info()
        cap = int(getattr(info, "vmem_capacity_bytes", cap) or cap)
    except Exception:
        pass
    return max(32 * _MIB, min(cap - 24 * _MIB, 96 * _MIB))


def _pick_tq(S, Din, H, Dout, act_bytes, cmp_bytes, vmem_limit):
    """Query-tile size: full sequence when the live set fits the VMEM budget,
    otherwise the largest sublane-legal divisor of S that fits (preferring
    multiples of 256/128 so the MXU M dimension is filled)."""
    min_tile = 8 if act_bytes >= 4 else 16   # sublane minimum (f32 vs packed)

    # tq-independent VMEM: weights/biases (single-buffered), the (1, S, Din)
    # audio block (double-buffered), and the K/V scratch.
    fixed = (3 * Din * H + H * Dout + 3 * H + Dout) * act_bytes
    fixed += 2 * S * Din * act_bytes
    fixed += 2 * S * H * cmp_bytes
    budget = (vmem_limit * 3) // 4 - fixed   # slack for vreg/VMEM temporaries

    def cost(tq):
        return (2 * tq * Din * act_bytes          # visual tile, 2 buffers
                + 2 * tq * Dout * act_bytes       # output tile, 2 buffers
                + 2 * tq * S * 4                  # f32 scores + exp
                + 4 * tq * H * 4)                 # q / attended temporaries

    if budget > 0 and cost(S) <= budget:
        return S                                  # one query tile per batch
    for tq in (1024, 512, 256, 128, 64, 32, 16, 8):
        if tq < min_tile:
            break
        if tq <= S and S % tq == 0 and cost(tq) <= budget:
            return tq
    # Very long / irregular S: fall back to a full-sequence tile.
    # TODO(synk): flash-style key tiling (third "arbitrary" grid axis over Sk
    # tiles with online-softmax m/l/acc scratch) for S where K/V + scores no
    # longer fit VMEM (matters first on v7x's 64 MiB).
    return S


def cross_modal_attention(audio_feat, visual_feat, params, *, tq=None,
                          compute_dtype=None, cache_kv=None):
    """audio_feat, visual_feat: (B, S, input_dim). Returns (B, S, output_dim).

    params = (wq, bq, wk, bk, wv, bv, wo, bo) with weights already transposed
    to (in_dim, out_dim) layout.
    """
    B, S, Din = audio_feat.shape
    wq, bq, wk, bk, wv, bv, wo, bo = params
    H = wq.shape[1]
    Dout = wo.shape[1]
    assert Dout == Din, "residual add requires output_dim == input_dim"

    if compute_dtype is None:
        # Attention matmuls follow the activation dtype: bf16 inputs run at
        # bf16 MXU throughput; f32 inputs keep exact f32 semantics. Pass
        # compute_dtype=jnp.bfloat16 to force bf16 matmuls for f32 inputs.
        compute_dtype = visual_feat.dtype

    act_bytes = jnp.dtype(visual_feat.dtype).itemsize
    cmp_bytes = jnp.dtype(compute_dtype).itemsize
    vmem_limit = _vmem_limit_bytes()

    if tq is None:
        tq = _pick_tq(S, Din, H, Dout, act_bytes, cmp_bytes, vmem_limit)
    assert S % tq == 0, "query tile must divide the sequence length"
    num_q = S // tq

    if cache_kv is None:
        # Cache K/V across query tiles whenever the batch axis alone can keep
        # both v7x TensorCores busy; for B == 1 keep the q axis "parallel"
        # (one redundant K/V projection per core) so a core isn't left idle.
        cache_kv = (num_q > 1) and (B >= 2)

    # Biases as (1, N) rows for clean lane broadcasting (cheap metadata ops).
    bq2 = bq.reshape(1, H)
    bk2 = bk.reshape(1, H)
    bv2 = bv.reshape(1, H)
    bo2 = bo.reshape(1, Dout)

    grid = (B, num_q)
    kernel_fn = functools.partial(_cross_modal_attention_kernel,
                                  cache_kv=cache_kv)
    dim_sem = ("parallel", "arbitrary") if cache_kv else ("parallel", "parallel")

    def make_call(weight_pipeline_mode):
        def wspec(shape):
            if weight_pipeline_mode is None:
                return pl.BlockSpec(shape, lambda b, q: (0, 0))
            return pl.BlockSpec(shape, lambda b, q: (0, 0),
                                pipeline_mode=weight_pipeline_mode)

        return pl.pallas_call(
            kernel_fn,
            out_shape=jax.ShapeDtypeStruct((B, S, Dout), visual_feat.dtype),
            grid=grid,
            in_specs=[
                # Audio block index depends only on b -> DMA'd once per batch.
                pl.BlockSpec((1, S, Din), lambda b, q: (b, 0, 0)),
                pl.BlockSpec((1, tq, Din), lambda b, q: (b, q, 0)),
                wspec((Din, H)), wspec((1, H)),       # wq, bq
                wspec((Din, H)), wspec((1, H)),       # wk, bk
                wspec((Din, H)), wspec((1, H)),       # wv, bv
                wspec((H, Dout)), wspec((1, Dout)),   # wo, bo
            ],
            out_specs=pl.BlockSpec((1, tq, Dout), lambda b, q: (b, q, 0)),
            scratch_shapes=[
                pltpu.VMEM((S, H), compute_dtype),    # K cache
                pltpu.VMEM((S, H), compute_dtype),    # V cache
            ],
            compiler_params=pltpu.CompilerParams(
                dimension_semantics=dim_sem,
                vmem_limit_bytes=vmem_limit,
            ),
        )

    args = (audio_feat, visual_feat, wq, bq2, wk, bk2, wv, bv2, wo, bo2)
    try:
        # Grid-invariant weights/biases: single-buffer them so the pipeline
        # does not allocate a second copy of the weight footprint in VMEM
        # (matters most on v7x's 64 MiB).
        return make_call(pl.Buffered(1))(*args)
    except Exception:
        # Fallback for environments where single-buffering an input is not
        # supported: default double-buffering (correct, slightly more VMEM).
        return make_call(None)(*args)


def init_params(key, input_dim, hidden_dim, output_dim, dtype=jnp.float32):
    """Deterministic nn.Linear-style params. Weights returned as (in, out)."""
    keys = jax.random.split(key, 8)

    def linear(kw, kb, fan_in, fan_out):
        bound = 1.0 / jnp.sqrt(fan_in)
        w = jax.random.uniform(kw, (fan_in, fan_out), dtype, -bound, bound)
        b = jax.random.uniform(kb, (fan_out,), dtype, -bound, bound)
        return w, b

    wq, bq = linear(keys[0], keys[1], input_dim, hidden_dim)
    wk, bk = linear(keys[2], keys[3], input_dim, hidden_dim)
    wv, bv = linear(keys[4], keys[5], input_dim, hidden_dim)
    wo, bo = linear(keys[6], keys[7], hidden_dim, output_dim)
    return (wq, bq, wk, bk, wv, bv, wo, bo)


def reference(audio, visual, params):
    """Pure-JAX reference mirroring the PyTorch forward (no 1/sqrt(d) scale)."""
    wq, bq, wk, bk, wv, bv, wo, bo = params
    q = visual @ wq + bq
    k = audio @ wk + bk
    v = audio @ wv + bv
    attn = jax.nn.softmax(jnp.einsum("bqh,bkh->bqk", q, k), axis=-1)
    attended = jnp.einsum("bqk,bkh->bqh", attn, v)
    return attended @ wo + bo + visual


if __name__ == "__main__":
    key = jax.random.PRNGKey(0)
    k_audio, k_visual, k_params = jax.random.split(key, 3)

    # Case 1: module-sized small shapes (single query tile, per-tile K/V path).
    B, S = 2, 8
    input_dim = hidden_dim = output_dim = 32   # residual needs out == in
    audio_feat = jax.random.normal(k_audio, (B, S, input_dim), jnp.float32)
    visual_feat = jax.random.normal(k_visual, (B, S, input_dim), jnp.float32)
    params = init_params(k_params, input_dim, hidden_dim, output_dim)

    out = jax.block_until_ready(
        cross_modal_attention(audio_feat, visual_feat, params))
    ref = reference(audio_feat, visual_feat, params)
    assert out.shape == (B, S, output_dim)
    assert jnp.allclose(out, ref, atol=1e-4, rtol=1e-4), "mismatch (single tile)"

    # Case 2: multiple query tiles -> exercises the K/V-in-VMEM-scratch path
    # (q axis "arbitrary", projection computed once per batch element).
    S2 = 16
    audio2 = jax.random.normal(k_audio, (B, S2, input_dim), jnp.float32)
    visual2 = jax.random.normal(k_visual, (B, S2, input_dim), jnp.float32)
    out2 = jax.block_until_ready(
        cross_modal_attention(audio2, visual2, params, tq=8))
    ref2 = reference(audio2, visual2, params)
    assert jnp.allclose(out2, ref2, atol=1e-4, rtol=1e-4), "mismatch (tiled q)"

    print("KERNEL_OK")
</pallas_src>

<mosaic_0001>
module attributes {stable_mosaic.version = 11 : i64} {
  func.func @_cross_modal_attention_kernel(%arg0: i32, %arg1: i32, %arg2: memref<1x8x32xf32, #tpu.memory_space<vmem>>, %arg3: memref<1x8x32xf32, #tpu.memory_space<vmem>>, %arg4: memref<32x32xf32, #tpu.memory_space<vmem>>, %arg5: memref<1x32xf32, #tpu.memory_space<vmem>>, %arg6: memref<32x32xf32, #tpu.memory_space<vmem>>, %arg7: memref<1x32xf32, #tpu.memory_space<vmem>>, %arg8: memref<32x32xf32, #tpu.memory_space<vmem>>, %arg9: memref<1x32xf32, #tpu.memory_space<vmem>>, %arg10: memref<32x32xf32, #tpu.memory_space<vmem>>, %arg11: memref<1x32xf32, #tpu.memory_space<vmem>>, %arg12: memref<1x8x32xf32, #tpu.memory_space<vmem>>, %arg13: memref<8x32xf32, #tpu.memory_space<vmem>>, %arg14: memref<8x32xf32, #tpu.memory_space<vmem>>) attributes {dimension_semantics = [#tpu.dimension_semantics<parallel>, #tpu.dimension_semantics<parallel>], iteration_bounds = array<i64: 2, 1>, scalar_prefetch = 0 : i64, scratch_operands = 2 : i64, tpu.core_type = #tpu.core_type<tc>, window_params = [{transform_indices = @transform_0, window_bounds = array<i64: 1, 8, 32>}, {transform_indices = @transform_1, window_bounds = array<i64: 1, 8, 32>}, {pipeline_mode = #tpu.pipeline_mode<synchronous>, transform_indices = @transform_2, window_bounds = array<i64: 32, 32>}, {pipeline_mode = #tpu.pipeline_mode<synchronous>, transform_indices = @transform_3, window_bounds = array<i64: 1, 32>}, {pipeline_mode = #tpu.pipeline_mode<synchronous>, transform_indices = @transform_4, window_bounds = array<i64: 32, 32>}, {pipeline_mode = #tpu.pipeline_mode<synchronous>, transform_indices = @transform_5, window_bounds = array<i64: 1, 32>}, {pipeline_mode = #tpu.pipeline_mode<synchronous>, transform_indices = @transform_6, window_bounds = array<i64: 32, 32>}, {pipeline_mode = #tpu.pipeline_mode<synchronous>, transform_indices = @transform_7, window_bounds = array<i64: 1, 32>}, {pipeline_mode = #tpu.pipeline_mode<synchronous>, transform_indices = @transform_8, window_bounds = array<i64: 32, 32>}, {pipeline_mode = #tpu.pipeline_mode<synchronous>, transform_indices = @transform_9, window_bounds = array<i64: 1, 32>}, {transform_indices = @transform_10, window_bounds = array<i64: 1, 8, 32>}]} {
    %c0 = arith.constant 0 : index
    %c0_0 = arith.constant 0 : index
    %c0_1 = arith.constant 0 : index
    %0 = vector.load %arg2[%c0, %c0_0, %c0_1] : memref<1x8x32xf32, #tpu.memory_space<vmem>>, vector<1x8x32xf32>
    %1 = vector.shape_cast %0 : vector<1x8x32xf32> to vector<8x32xf32>
    %c0_2 = arith.constant 0 : index
    %c0_3 = arith.constant 0 : index
    %2 = vector.load %arg6[%c0_2, %c0_3] : memref<32x32xf32, #tpu.memory_space<vmem>>, vector<32x32xf32>
    %cst = arith.constant dense<0.000000e+00> : vector<8x32xf32>
    %3 = tpu.matmul %1, %2, %cst {dimension_numbers = #tpu.dot_dimension_numbers<[1], [0], [0], [1], [0, 0, 1, 1], [], []>} : vector<8x32xf32>, vector<32x32xf32>, vector<8x32xf32> -> vector<8x32xf32>
    %c0_4 = arith.constant 0 : index
    %c0_5 = arith.constant 0 : index
    %4 = vector.load %arg7[%c0_4, %c0_5] : memref<1x32xf32, #tpu.memory_space<vmem>>, vector<1x32xf32>
    %5 = vector.broadcast %4 : vector<1x32xf32> to vector<8x32xf32>
    %6 = arith.addf %3, %5 : vector<8x32xf32>
    %c0_6 = arith.constant 0 : index
    %c0_7 = arith.constant 0 : index
    %7 = vector.load %arg8[%c0_6, %c0_7] : memref<32x32xf32, #tpu.memory_space<vmem>>, vector<32x32xf32>
    %cst_8 = arith.constant dense<0.000000e+00> : vector<8x32xf32>
    %8 = tpu.matmul %1, %7, %cst_8 {dimension_numbers = #tpu.dot_dimension_numbers<[1], [0], [0], [1], [0, 0, 1, 1], [], []>} : vector<8x32xf32>, vector<32x32xf32>, vector<8x32xf32> -> vector<8x32xf32>
    %c0_9 = arith.constant 0 : index
    %c0_10 = arith.constant 0 : index
    %9 = vector.load %arg9[%c0_9, %c0_10] : memref<1x32xf32, #tpu.memory_space<vmem>>, vector<1x32xf32>
    %10 = vector.broadcast %9 : vector<1x32xf32> to vector<8x32xf32>
    %11 = arith.addf %8, %10 : vector<8x32xf32>
    %c0_11 = arith.constant 0 : index
    %c0_12 = arith.constant 0 : index
    %12 = vector.load %arg13[%c0_11, %c0_12] : memref<8x32xf32, #tpu.memory_space<vmem>>, vector<8x32xf32>
    tpu.vector_store %arg13[%c0_11, %c0_12], %6 {strides = array<i32>} : memref<8x32xf32, #tpu.memory_space<vmem>>, vector<8x32xf32>,
    %c0_13 = arith.constant 0 : index
    %c0_14 = arith.constant 0 : index
    %13 = vector.load %arg14[%c0_13, %c0_14] : memref<8x32xf32, #tpu.memory_space<vmem>>, vector<8x32xf32>
    tpu.vector_store %arg14[%c0_13, %c0_14], %11 {strides = array<i32>} : memref<8x32xf32, #tpu.memory_space<vmem>>, vector<8x32xf32>,
    %c0_15 = arith.constant 0 : index
    %c0_16 = arith.constant 0 : index
    %c0_17 = arith.constant 0 : index
    %14 = vector.load %arg3[%c0_15, %c0_16, %c0_17] : memref<1x8x32xf32, #tpu.memory_space<vmem>>, vector<1x8x32xf32>
    %15 = vector.shape_cast %14 : vector<1x8x32xf32> to vector<8x32xf32>
    %c0_18 = arith.constant 0 : index
    %c0_19 = arith.constant 0 : index
    %16 = vector.load %arg4[%c0_18, %c0_19] : memref<32x32xf32, #tpu.memory_space<vmem>>, vector<32x32xf32>
    %cst_20 = arith.constant dense<0.000000e+00> : vector<8x32xf32>
    %17 = tpu.matmul %15, %16, %cst_20 {dimension_numbers = #tpu.dot_dimension_numbers<[1], [0], [0], [1], [0, 0, 1, 1], [], []>} : vector<8x32xf32>, vector<32x32xf32>, vector<8x32xf32> -> vector<8x32xf32>
    %c0_21 = arith.constant 0 : index
    %c0_22 = arith.constant 0 : index
    %18 = vector.load %arg5[%c0_21, %c0_22] : memref<1x32xf32, #tpu.memory_space<vmem>>, vector<1x32xf32>
    %19 = vector.broadcast %18 : vector<1x32xf32> to vector<8x32xf32>
    %20 = arith.addf %17, %19 : vector<8x32xf32>
    %c0_23 = arith.constant 0 : index
    %c0_24 = arith.constant 0 : index
    %21 = vector.load %arg13[%c0_23, %c0_24] : memref<8x32xf32, #tpu.memory_space<vmem>>, vector<8x32xf32>
    %cst_25 = arith.constant dense<0.000000e+00> : vector<8x8xf32>
    %22 = tpu.matmul %20, %21, %cst_25 {dimension_numbers = #tpu.dot_dimension_numbers<[1], [1], [0], [0], [0, 0, 1, 0], [], []>} : vector<8x32xf32>, vector<8x32xf32>, vector<8x8xf32> -> vector<8x8xf32>
    %cst_26 = arith.constant dense<0xFF800000> : vector<8xf32>
    %23 = vector.multi_reduction <maximumf>, %22, %cst_26 [1] : vector<8x8xf32> to vector<8xf32>
    %24 = vector.shape_cast %23 : vector<8xf32> to vector<8x1xf32>
    %25 = vector.broadcast %24 : vector<8x1xf32> to vector<8x8xf32>
    %26 = arith.subf %22, %25 : vector<8x8xf32>
    %27 = math.exp %26 : vector<8x8xf32>
    %cst_27 = arith.constant dense<0.000000e+00> : vector<8xf32>
    %28 = vector.multi_reduction <add>, %27, %cst_27 [1] : vector<8x8xf32> to vector<8xf32>
    %29 = vector.shape_cast %28 : vector<8xf32> to vector<8x1xf32>
    %c0_28 = arith.constant 0 : index
    %c0_29 = arith.constant 0 : index
    %30 = vector.load %arg14[%c0_28, %c0_29] : memref<8x32xf32, #tpu.memory_space<vmem>>, vector<8x32xf32>
    %cst_30 = arith.constant dense<0.000000e+00> : vector<8x32xf32>
    %31 = tpu.matmul %27, %30, %cst_30 {dimension_numbers = #tpu.dot_dimension_numbers<[1], [0], [0], [1], [0, 0, 1, 1], [], []>} : vector<8x8xf32>, vector<8x32xf32>, vector<8x32xf32> -> vector<8x32xf32>
    %32 = tpu.reciprocal %29 : vector<8x1xf32> -> vector<8x1xf32>
    %33 = vector.broadcast %32 : vector<8x1xf32> to vector<8x32xf32>
    %34 = arith.mulf %31, %33 : vector<8x32xf32>
    %c0_31 = arith.constant 0 : index
    %c0_32 = arith.constant 0 : index
    %35 = vector.load %arg10[%c0_31, %c0_32] : memref<32x32xf32, #tpu.memory_space<vmem>>, vector<32x32xf32>
    %cst_33 = arith.constant dense<0.000000e+00> : vector<8x32xf32>
    %36 = tpu.matmul %34, %35, %cst_33 {dimension_numbers = #tpu.dot_dimension_numbers<[1], [0], [0], [1], [0, 0, 1, 1], [], []>} : vector<8x32xf32>, vector<32x32xf32>, vector<8x32xf32> -> vector<8x32xf32>
    %c0_34 = arith.constant 0 : index
    %c0_35 = arith.constant 0 : index
    %37 = vector.load %arg11[%c0_34, %c0_35] : memref<1x32xf32, #tpu.memory_space<vmem>>, vector<1x32xf32>
    %38 = vector.broadcast %37 : vector<1x32xf32> to vector<8x32xf32>
    %39 = arith.addf %36, %38 : vector<8x32xf32>
    %40 = arith.addf %39, %15 : vector<8x32xf32>
    %c0_36 = arith.constant 0 : index
    %c0_37 = arith.constant 0 : index
    %c0_38 = arith.constant 0 : index
    %41 = vector.load %arg12[%c0_36, %c0_37, %c0_38] : memref<1x8x32xf32, #tpu.memory_space<vmem>>, vector<1x8x32xf32>
    %42 = vector.shape_cast %41 : vector<1x8x32xf32> to vector<8x32xf32>
    %43 = vector.shape_cast %40 : vector<8x32xf32> to vector<1x8x32xf32>
    tpu.vector_store %arg12[%c0_36, %c0_37, %c0_38], %43 {strides = array<i32>} : memref<1x8x32xf32, #tpu.memory_space<vmem>>, vector<1x8x32xf32>,
    return
  }
  func.func @transform_0(%arg0: i32, %arg1: i32) -> (i32, i32, i32) {
    %c0_i32 = arith.constant 0 : i32
    %c0_i32_0 = arith.constant 0 : i32
    %c0_i32_1 = arith.constant 0 : i32
    return %arg0, %c0_i32, %c0_i32_0 : i32, i32, i32
  }
  func.func @transform_1(%arg0: i32, %arg1: i32) -> (i32, i32, i32) {
    %c0_i32 = arith.constant 0 : i32
    %c0_i32_0 = arith.constant 0 : i32
    return %arg0, %arg1, %c0_i32 : i32, i32, i32
  }
  func.func @transform_2(%arg0: i32, %arg1: i32) -> (i32, i32) {
    %c0_i32 = arith.constant 0 : i32
    %c0_i32_0 = arith.constant 0 : i32
    %c0_i32_1 = arith.constant 0 : i32
    return %c0_i32, %c0_i32_0 : i32, i32
  }
  func.func @transform_3(%arg0: i32, %arg1: i32) -> (i32, i32) {
    %c0_i32 = arith.constant 0 : i32
    %c0_i32_0 = arith.constant 0 : i32
    %c0_i32_1 = arith.constant 0 : i32
    return %c0_i32, %c0_i32_0 : i32, i32
  }
  func.func @transform_4(%arg0: i32, %arg1: i32) -> (i32, i32) {
    %c0_i32 = arith.constant 0 : i32
    %c0_i32_0 = arith.constant 0 : i32
    %c0_i32_1 = arith.constant 0 : i32
    return %c0_i32, %c0_i32_0 : i32, i32
  }
  func.func @transform_5(%arg0: i32, %arg1: i32) -> (i32, i32) {
    %c0_i32 = arith.constant 0 : i32
    %c0_i32_0 = arith.constant 0 : i32
    %c0_i32_1 = arith.constant 0 : i32
    return %c0_i32, %c0_i32_0 : i32, i32
  }
  func.func @transform_6(%arg0: i32, %arg1: i32) -> (i32, i32) {
    %c0_i32 = arith.constant 0 : i32
    %c0_i32_0 = arith.constant 0 : i32
    %c0_i32_1 = arith.constant 0 : i32
    return %c0_i32, %c0_i32_0 : i32, i32
  }
  func.func @transform_7(%arg0: i32, %arg1: i32) -> (i32, i32) {
    %c0_i32 = arith.constant 0 : i32
    %c0_i32_0 = arith.constant 0 : i32
    %c0_i32_1 = arith.constant 0 : i32
    return %c0_i32, %c0_i32_0 : i32, i32
  }
  func.func @transform_8(%arg0: i32, %arg1: i32) -> (i32, i32) {
    %c0_i32 = arith.constant 0 : i32
    %c0_i32_0 = arith.constant 0 : i32
    %c0_i32_1 = arith.constant 0 : i32
    return %c0_i32, %c0_i32_0 : i32, i32
  }
  func.func @transform_9(%arg0: i32, %arg1: i32) -> (i32, i32) {
    %c0_i32 = arith.constant 0 : i32
    %c0_i32_0 = arith.constant 0 : i32
    %c0_i32_1 = arith.constant 0 : i32
    return %c0_i32, %c0_i32_0 : i32, i32
  }
  func.func @transform_10(%arg0: i32, %arg1: i32) -> (i32, i32, i32) {
    %c0_i32 = arith.constant 0 : i32
    %c0_i32_0 = arith.constant 0 : i32
    return %arg0, %arg1, %c0_i32 : i32, i32, i32
  }
}

module attributes {stable_mosaic.version = 11 : i64} {
  func.func @_cross_modal_attention_kernel(%arg0: i32, %arg1: i32, %arg2: memref<1x8x32xf32, #tpu.memory_space<vmem>>, %arg3: memref<1x8x32xf32, #tpu.memory_space<vmem>>, %arg4: memref<32x32xf32, #tpu.memory_space<vmem>>, %arg5: memref<1x32xf32, #tpu.memory_space<vmem>>, %arg6: memref<32x32xf32, #tpu.memory_space<vmem>>, %arg7: memref<1x32xf32, #tpu.memory_space<vmem>>, %arg8: memref<32x32xf32, #tpu.memory_space<vmem>>, %arg9: memref<1x32xf32, #tpu.memory_space<vmem>>, %arg10: memref<32x32xf32, #tpu.memory_space<vmem>>, %arg11: memref<1x32xf32, #tpu.memory_space<vmem>>, %arg12: memref<1x8x32xf32, #tpu.memory_space<vmem>>, %arg13: memref<8x32xf32, #tpu.memory_space<vmem>>, %arg14: memref<8x32xf32, #tpu.memory_space<vmem>>) attributes {dimension_semantics = [#tpu.dimension_semantics<parallel>, #tpu.dimension_semantics<parallel>], iteration_bounds = array<i64: 2, 1>, scalar_prefetch = 0 : i64, scratch_operands = 2 : i64, tpu.core_type = #tpu.core_type<tc>, window_params = [{transform_indices = @transform_0, window_bounds = array<i64: 1, 8, 32>}, {transform_indices = @transform_1, window_bounds = array<i64: 1, 8, 32>}, {pipeline_mode = #tpu.pipeline_mode<synchronous>, transform_indices = @transform_2, window_bounds = array<i64: 32, 32>}, {pipeline_mode = #tpu.pipeline_mode<synchronous>, transform_indices = @transform_3, window_bounds = array<i64: 1, 32>}, {pipeline_mode = #tpu.pipeline_mode<synchronous>, transform_indices = @transform_4, window_bounds = array<i64: 32, 32>}, {pipeline_mode = #tpu.pipeline_mode<synchronous>, transform_indices = @transform_5, window_bounds = array<i64: 1, 32>}, {pipeline_mode = #tpu.pipeline_mode<synchronous>, transform_indices = @transform_6, window_bounds = array<i64: 32, 32>}, {pipeline_mode = #tpu.pipeline_mode<synchronous>, transform_indices = @transform_7, window_bounds = array<i64: 1, 32>}, {pipeline_mode = #tpu.pipeline_mode<synchronous>, transform_indices = @transform_8, window_bounds = array<i64: 32, 32>}, {pipeline_mode = #tpu.pipeline_mode<synchronous>, transform_indices = @transform_9, window_bounds = array<i64: 1, 32>}, {transform_indices = @transform_10, window_bounds = array<i64: 1, 8, 32>}]} {
    %c0 = arith.constant 0 : index
    %c0_0 = arith.constant 0 : index
    %c0_1 = arith.constant 0 : index
    %0 = vector.load %arg2[%c0, %c0_0, %c0_1] : memref<1x8x32xf32, #tpu.memory_space<vmem>>, vector<1x8x32xf32>
    %1 = vector.shape_cast %0 : vector<1x8x32xf32> to vector<8x32xf32>
    %c0_2 = arith.constant 0 : index
    %c0_3 = arith.constant 0 : index
    %2 = vector.load %arg6[%c0_2, %c0_3] : memref<32x32xf32, #tpu.memory_space<vmem>>, vector<32x32xf32>
    %cst = arith.constant dense<0.000000e+00> : vector<8x32xf32>
    %3 = tpu.matmul %1, %2, %cst {dimension_numbers = #tpu.dot_dimension_numbers<[1], [0], [0], [1], [0, 0, 1, 1], [], []>} : vector<8x32xf32>, vector<32x32xf32>, vector<8x32xf32> -> vector<8x32xf32>
    %c0_4 = arith.constant 0 : index
    %c0_5 = arith.constant 0 : index
    %4 = vector.load %arg7[%c0_4, %c0_5] : memref<1x32xf32, #tpu.memory_space<vmem>>, vector<1x32xf32>
    %5 = vector.broadcast %4 : vector<1x32xf32> to vector<8x32xf32>
    %6 = arith.addf %3, %5 : vector<8x32xf32>
    %c0_6 = arith.constant 0 : index
    %c0_7 = arith.constant 0 : index
    %7 = vector.load %arg8[%c0_6, %c0_7] : memref<32x32xf32, #tpu.memory_space<vmem>>, vector<32x32xf32>
    %cst_8 = arith.constant dense<0.000000e+00> : vector<8x32xf32>
    %8 = tpu.matmul %1, %7, %cst_8 {dimension_numbers = #tpu.dot_dimension_numbers<[1], [0], [0], [1], [0, 0, 1, 1], [], []>} : vector<8x32xf32>, vector<32x32xf32>, vector<8x32xf32> -> vector<8x32xf32>
    %c0_9 = arith.constant 0 : index
    %c0_10 = arith.constant 0 : index
    %9 = vector.load %arg9[%c0_9, %c0_10] : memref<1x32xf32, #tpu.memory_space<vmem>>, vector<1x32xf32>
    %10 = vector.broadcast %9 : vector<1x32xf32> to vector<8x32xf32>
    %11 = arith.addf %8, %10 : vector<8x32xf32>
    %c0_11 = arith.constant 0 : index
    %c0_12 = arith.constant 0 : index
    %12 = vector.load %arg13[%c0_11, %c0_12] : memref<8x32xf32, #tpu.memory_space<vmem>>, vector<8x32xf32>
    tpu.vector_store %arg13[%c0_11, %c0_12], %6 {strides = array<i32>} : memref<8x32xf32, #tpu.memory_space<vmem>>, vector<8x32xf32>,
    %c0_13 = arith.constant 0 : index
    %c0_14 = arith.constant 0 : index
    %13 = vector.load %arg14[%c0_13, %c0_14] : memref<8x32xf32, #tpu.memory_space<vmem>>, vector<8x32xf32>
    tpu.vector_store %arg14[%c0_13, %c0_14], %11 {strides = array<i32>} : memref<8x32xf32, #tpu.memory_space<vmem>>, vector<8x32xf32>,
    %c0_15 = arith.constant 0 : index
    %c0_16 = arith.constant 0 : index
    %c0_17 = arith.constant 0 : index
    %14 = vector.load %arg3[%c0_15, %c0_16, %c0_17] : memref<1x8x32xf32, #tpu.memory_space<vmem>>, vector<1x8x32xf32>
    %15 = vector.shape_cast %14 : vector<1x8x32xf32> to vector<8x32xf32>
    %c0_18 = arith.constant 0 : index
    %c0_19 = arith.constant 0 : index
    %16 = vector.load %arg4[%c0_18, %c0_19] : memref<32x32xf32, #tpu.memory_space<vmem>>, vector<32x32xf32>
    %cst_20 = arith.constant dense<0.000000e+00> : vector<8x32xf32>
    %17 = tpu.matmul %15, %16, %cst_20 {dimension_numbers = #tpu.dot_dimension_numbers<[1], [0], [0], [1], [0, 0, 1, 1], [], []>} : vector<8x32xf32>, vector<32x32xf32>, vector<8x32xf32> -> vector<8x32xf32>
    %c0_21 = arith.constant 0 : index
    %c0_22 = arith.constant 0 : index
    %18 = vector.load %arg5[%c0_21, %c0_22] : memref<1x32xf32, #tpu.memory_space<vmem>>, vector<1x32xf32>
    %19 = vector.broadcast %18 : vector<1x32xf32> to vector<8x32xf32>
    %20 = arith.addf %17, %19 : vector<8x32xf32>
    %c0_23 = arith.constant 0 : index
    %c0_24 = arith.constant 0 : index
    %21 = vector.load %arg13[%c0_23, %c0_24] : memref<8x32xf32, #tpu.memory_space<vmem>>, vector<8x32xf32>
    %cst_25 = arith.constant dense<0.000000e+00> : vector<8x8xf32>
    %22 = tpu.matmul %20, %21, %cst_25 {dimension_numbers = #tpu.dot_dimension_numbers<[1], [1], [0], [0], [0, 0, 1, 0], [], []>} : vector<8x32xf32>, vector<8x32xf32>, vector<8x8xf32> -> vector<8x8xf32>
    %cst_26 = arith.constant dense<0xFF800000> : vector<8xf32>
    %23 = vector.multi_reduction <maximumf>, %22, %cst_26 [1] : vector<8x8xf32> to vector<8xf32>
    %24 = vector.shape_cast %23 : vector<8xf32> to vector<8x1xf32>
    %25 = vector.broadcast %24 : vector<8x1xf32> to vector<8x8xf32>
    %26 = arith.subf %22, %25 : vector<8x8xf32>
    %27 = math.exp %26 : vector<8x8xf32>
    %cst_27 = arith.constant dense<0.000000e+00> : vector<8xf32>
    %28 = vector.multi_reduction <add>, %27, %cst_27 [1] : vector<8x8xf32> to vector<8xf32>
    %29 = vector.shape_cast %28 : vector<8xf32> to vector<8x1xf32>
    %c0_28 = arith.constant 0 : index
    %c0_29 = arith.constant 0 : index
    %30 = vector.load %arg14[%c0_28, %c0_29] : memref<8x32xf32, #tpu.memory_space<vmem>>, vector<8x32xf32>
    %cst_30 = arith.constant dense<0.000000e+00> : vector<8x32xf32>
    %31 = tpu.matmul %27, %30, %cst_30 {dimension_numbers = #tpu.dot_dimension_numbers<[1], [0], [0], [1], [0, 0, 1, 1], [], []>} : vector<8x8xf32>, vector<8x32xf32>, vector<8x32xf32> -> vector<8x32xf32>
    %32 = tpu.reciprocal %29 : vector<8x1xf32> -> vector<8x1xf32>
    %33 = vector.broadcast %32 : vector<8x1xf32> to vector<8x32xf32>
    %34 = arith.mulf %31, %33 : vector<8x32xf32>
    %c0_31 = arith.constant 0 : index
    %c0_32 = arith.constant 0 : index
    %35 = vector.load %arg10[%c0_31, %c0_32] : memref<32x32xf32, #tpu.memory_space<vmem>>, vector<32x32xf32>
    %cst_33 = arith.constant dense<0.000000e+00> : vector<8x32xf32>
    %36 = tpu.matmul %34, %35, %cst_33 {dimension_numbers = #tpu.dot_dimension_numbers<[1], [0], [0], [1], [0, 0, 1, 1], [], []>} : vector<8x32xf32>, vector<32x32xf32>, vector<8x32xf32> -> vector<8x32xf32>
    %c0_34 = arith.constant 0 : index
    %c0_35 = arith.constant 0 : index
    %37 = vector.load %arg11[%c0_34, %c0_35] : memref<1x32xf32, #tpu.memory_space<vmem>>, vector<1x32xf32>
    %38 = vector.broadcast %37 : vector<1x32xf32> to vector<8x32xf32>
    %39 = arith.addf %36, %38 : vector<8x32xf32>
    %40 = arith.addf %39, %15 : vector<8x32xf32>
    %c0_36 = arith.constant 0 : index
    %c0_37 = arith.constant 0 : index
    %c0_38 = arith.constant 0 : index
    %41 = vector.load %arg12[%c0_36, %c0_37, %c0_38] : memref<1x8x32xf32, #tpu.memory_space<vmem>>, vector<1x8x32xf32>
    %42 = vector.shape_cast %41 : vector<1x8x32xf32> to vector<8x32xf32>
    %43 = vector.shape_cast %40 : vector<8x32xf32> to vector<1x8x32xf32>
    tpu.vector_store %arg12[%c0_36, %c0_37, %c0_38], %43 {strides = array<i32>} : memref<1x8x32xf32, #tpu.memory_space<vmem>>, vector<1x8x32xf32>,
    return
  }
  func.func @transform_0(%arg0: i32, %arg1: i32) -> (i32, i32, i32) {
    %c0_i32 = arith.constant 0 : i32
    %c0_i32_0 = arith.constant 0 : i32
    %c0_i32_1 = arith.constant 0 : i32
    return %arg0, %c0_i32, %c0_i32_0 : i32, i32, i32
  }
  func.func @transform_1(%arg0: i32, %arg1: i32) -> (i32, i32, i32) {
    %c0_i32 = arith.constant 0 : i32
    %c0_i32_0 = arith.constant 0 : i32
    return %arg0, %arg1, %c0_i32 : i32, i32, i32
  }
  func.func @transform_2(%arg0: i32, %arg1: i32) -> (i32, i32) {
    %c0_i32 = arith.constant 0 : i32
    %c0_i32_0 = arith.constant 0 : i32
    %c0_i32_1 = arith.constant 0 : i32
    return %c0_i32, %c0_i32_0 : i32, i32
  }
  func.func @transform_3(%arg0: i32, %arg1: i32) -> (i32, i32) {
    %c0_i32 = arith.constant 0 : i32
    %c0_i32_0 = arith.constant 0 : i32
    %c0_i32_1 = arith.constant 0 : i32
    return %c0_i32, %c0_i32_0 : i32, i32
  }
  func.func @transform_4(%arg0: i32, %arg1: i32) -> (i32, i32) {
    %c0_i32 = arith.constant 0 : i32
    %c0_i32_0 = arith.constant 0 : i32
    %c0_i32_1 = arith.constant 0 : i32
    return %c0_i32, %c0_i32_0 : i32, i32
  }
  func.func @transform_5(%arg0: i32, %arg1: i32) -> (i32, i32) {
    %c0_i32 = arith.constant 0 : i32
    %c0_i32_0 = arith.constant 0 : i32
    %c0_i32_1 = arith.constant 0 : i32
    return %c0_i32, %c0_i32_0 : i32, i32
  }
  func.func @transform_6(%arg0: i32, %arg1: i32) -> (i32, i32) {
    %c0_i32 = arith.constant 0 : i32
    %c0_i32_0 = arith.constant 0 : i32
    %c0_i32_1 = arith.constant 0 : i32
    return %c0_i32, %c0_i32_0 : i32, i32
  }
  func.func @transform_7(%arg0: i32, %arg1: i32) -> (i32, i32) {
    %c0_i32 = arith.constant 0 : i32
    %c0_i32_0 = arith.constant 0 : i32
    %c0_i32_1 = arith.constant 0 : i32
    return %c0_i32, %c0_i32_0 : i32, i32
  }
  func.func @transform_8(%arg0: i32, %arg1: i32) -> (i32, i32) {
    %c0_i32 = arith.constant 0 : i32
    %c0_i32_0 = arith.constant 0 : i32
    %c0_i32_1 = arith.constant 0 : i32
    return %c0_i32, %c0_i32_0 : i32, i32
  }
  func.func @transform_9(%arg0: i32, %arg1: i32) -> (i32, i32) {
    %c0_i32 = arith.constant 0 : i32
    %c0_i32_0 = arith.constant 0 : i32
    %c0_i32_1 = arith.constant 0 : i32
    return %c0_i32, %c0_i32_0 : i32, i32
  }
  func.func @transform_10(%arg0: i32, %arg1: i32) -> (i32, i32, i32) {
    %c0_i32 = arith.constant 0 : i32
    %c0_i32_0 = arith.constant 0 : i32
    return %arg0, %arg1, %c0_i32 : i32, i32, i32
  }
}

</mosaic_0001>

<llo_original>
// kernel: tpu_custom_call.1
$region0: #{tpu_custom_call.1}
  #allocation0 [shape = 'u32[]', space=smem, size = 0x4, offset = 0x4, fixed_abs, tag = 'smem constant byte address 0x4 - core index']
  #allocation1 [shape = 'u32[144,128]{1,0:T(1,128)}', space=vmem, size = 0x12000, scoped, tag = 'internal scratch']
  #allocation2 [shape = 'f32[8,32]{1,0:T(8,128)}', space=vmem, size = 0x1000, scoped, tag = 'scratch operand']
  #allocation3 [shape = 'f32[8,32]{1,0:T(8,128)}', space=vmem, size = 0x1000, scoped, tag = 'scratch operand']
  %s0 = inlined_call_operand.hbm [shape: f32[2,8,32], index: 0, kind: input, shape index: {}]
  %s1 = inlined_call_operand.hbm [shape: f32[2,8,32], index: 1, kind: input, shape index: {}]
  %s2 = inlined_call_operand.hbm [shape: f32[32,32], index: 2, kind: input, shape index: {}]
  %s3 = inlined_call_operand.vmem [shape: f32[1,32], index: 3, kind: input, shape index: {}]
  %s4 = inlined_call_operand.hbm [shape: f32[32,32], index: 4, kind: input, shape index: {}]
  %s5 = inlined_call_operand.vmem [shape: f32[1,32], index: 5, kind: input, shape index: {}]
  %s6 = inlined_call_operand.hbm [shape: f32[32,32], index: 6, kind: input, shape index: {}]
  %s7 = inlined_call_operand.vmem [shape: f32[1,32], index: 7, kind: input, shape index: {}]
  %s8 = inlined_call_operand.hbm [shape: f32[32,32], index: 8, kind: input, shape index: {}]
  %s9 = inlined_call_operand.vmem [shape: f32[1,32], index: 9, kind: input, shape index: {}]
  %s10 = inlined_call_operand.hbm [shape: f32[2,8,32], index: 10, kind: output, shape index: {}]
  %s11 = sld [smem:[#allocation0]]
  $region97: #{tpu_custom_call.1} parent=0
    _
  %s13 = ssub.s32 1, %s11
  %s14 = scalar_select 0, %s13, %s11
  $region1: #{tpu_custom_call.1} parent=0
    #allocation4 [shape = 'u8[8192]{0}', space=vmem, size = 0x2000, scoped, tag = 'input window, operand 0']
    #allocation5 [shape = 's32[2]{0}', space=sflag, size = 0x8, scoped, tag = 'scoped memory for tpu_custom_call.1']
    #allocation6 [shape = 's32[2]{0}', space=sflag, size = 0x8, scoped, tag = 'scoped memory for tpu_custom_call.1']
    #allocation7 [shape = 'u8[8192]{0}', space=vmem, size = 0x2000, scoped, tag = 'input window, operand 1']
    #allocation8 [shape = 's32[2]{0}', space=sflag, size = 0x8, scoped, tag = 'scoped memory for tpu_custom_call.1']
    #allocation9 [shape = 'u8[16384]{0}', space=vmem, size = 0x4000, scoped, tag = 'input window, operand 2, single buffered']
    #allocation10 [shape = 'u8[16384]{0}', space=vmem, size = 0x4000, scoped, tag = 'input window, operand 4, single buffered']
    #allocation11 [shape = 's32[1]{0}', space=sflag, size = 0x4, scoped, tag = 'scoped memory for tpu_custom_call.1']
    #allocation12 [shape = 'u8[16384]{0}', space=vmem, size = 0x4000, scoped, tag = 'input window, operand 6, single buffered']
    #allocation13 [shape = 'u8[16384]{0}', space=vmem, size = 0x4000, scoped, tag = 'input window, operand 8, single buffered']
    #allocation14 [shape = 's32[1]{0}', space=sflag, size = 0x4, scoped, tag = 'scoped memory for tpu_custom_call.1']
    #allocation15 [shape = 'u8[8192]{0}', space=vmem, size = 0x2000, scoped, tag = 'output window, operand 0']
    %15 = vsyncpa [#allocation5], 0
    %s16 = scalar_lea.sflag [#allocation5], 1
    %17 = vsyncpa %s16, 0
    %18 = vsyncpa [#allocation8], 0
    %s19 = scalar_lea.sflag [#allocation8], 1
    %20 = vsyncpa %s19, 0
    %21 = vsyncpa [#allocation11], 0
    %22 = vsyncpa [#allocation14], 0
    %23 = vsyncpa [#allocation6], 0
    %s24 = scalar_lea.sflag [#allocation6], 1
    %25 = vsyncpa %s24, 0
    loop: start=0, step=1, limit=4
    $region2: #{tpu_custom_call.1} parent=1 // loop_pre_header
      _
    $region3: #{tpu_custom_call.1} parent=1 // loop_header
      %s27 = sphi 0, %s31
      %p28 = scmp.ge.s32.totalorder %s27, 4
      %s34 = sphi 0, %s46
      %s35 = sphi 0, %s42
      %s36 = sphi 0, %s34
      %s37 = sphi 0, %s35
      %s38 = sphi 0, %s36
      %s39 = sphi 0, %s37
      %s49 = sphi 0, %s51
      %s52 = sphi 0, %s49
      %s53 = sphi 0, %s52
      %s69 = sphi 0, %s53
      %s77 = sphi 0, %s79
      %s80 = sphi 0, %s77
      %s81 = sphi 0, %s80
      %s97 = sphi 0, %s81
      %s101 = sphi 0, %s101
      %s103 = sphi 0, %s101
      %s104 = sphi 0, %s103
      %s118 = sphi 0, %s104
      %s122 = sphi 0, %s122
      %s124 = sphi 0, %s122
      %s125 = sphi 0, %s124
      %s139 = sphi 0, %s125
      %s143 = sphi 0, %s143
      %s145 = sphi 0, %s143
      %s146 = sphi 0, %s145
      %s160 = sphi 0, %s146
      %s164 = sphi 0, %s164
      %s166 = sphi 0, %s164
      %s167 = sphi 0, %s166
      %s181 = sphi 0, %s167
      %s185 = sphi 0, %s185
      %s187 = sphi 0, %s185
      %s188 = sphi 0, %s187
      %s202 = sphi 0, %s188
      %s206 = sphi 0, %s206
      %s208 = sphi 0, %s206
      %s209 = sphi 0, %s208
      %s223 = sphi 0, %s209
      %s227 = sphi 0, %s227
      %s229 = sphi 0, %s227
      %s230 = sphi 0, %s229
      %s244 = sphi 0, %s230
      %s248 = sphi 0, %s248
      %s250 = sphi 0, %s248
      %s251 = sphi 0, %s250
      %s265 = sphi 0, %s251
      %s273 = sphi 0, %s275
      %s276 = sphi 0, %s273
      %s277 = sphi 0, %s276
      %s293 = sphi 0, %s277
    $region4: #{tpu_custom_call.1} parent=1 // loop_header_branch
      %30 = sbr.rel (%p28) target = $region8
    $region5: #{tpu_custom_call.1} parent=1 // loop_body
      %s32 = ssub.s32 %s27, 1
      %s33 = ssub.s32 %s27, 2
      %s40 = sadd.s32 1, %s35
      %p41 = scmp.ge.s32.totalorder %s40, 1
      %s42 = scalar_select %p41, 0, %s40
      %s43 = sadd.s32 1, %s34
      %s44 = scalar_select %p41, %s43, %s34
      %p45 = scmp.ge.s32.totalorder %s44, 2
      %s46 = scalar_select %p45, 0, %s44
      %s47 = ssub.s32 %s34, %s46
      %p48 = scmp.eq.s32.totalorder %s47, 0
      %s50 = sadd.s32 %s49, 1
      %s51 = scalar_select %p48, %s49, %s50
      %p54 = pneg %p48
      %p55 = scmp.eq.s32.totalorder %s27, 1
      %p56 = por %p54, %p55
      %p57 = scmp.ne.s32.totalorder %s49, %s52
      %p58 = scmp.eq.s32.totalorder %s27, 0
      %p59 = por %p57, %p58
      %p60 = scmp.ne.s32.totalorder %s49, %s52
      %p61 = scmp.eq.s32.totalorder %s32, 1
      %p62 = por %p60, %p61
      %p63 = scmp.ne.s32.totalorder %s52, %s53
      %p64 = scmp.eq.s32.totalorder %s32, 0
      %p65 = por %p63, %p64
      %p66 = scmp.ne.s32.totalorder %s52, %s53
      %p67 = scmp.eq.s32.totalorder %s33, 1
      %p68 = por %p66, %p67
      %p70 = scmp.ne.s32.totalorder %s53, %s69
      %p71 = scmp.eq.s32.totalorder %s33, 0
      %p72 = por %p70, %p71
      %s73 = ssub.s32 %s34, %s46
      %s74 = ssub.s32 %s35, %s42
      %s75 = sor.u32 %s73, %s74
      %p76 = scmp.eq.s32.totalorder %s75, 0
      %s78 = sadd.s32 %s77, 1
      %s79 = scalar_select %p76, %s77, %s78
      %p82 = pneg %p76
      %p83 = scmp.eq.s32.totalorder %s27, 1
      %p84 = por %p82, %p83
      %p85 = scmp.ne.s32.totalorder %s77, %s80
      %p86 = scmp.eq.s32.totalorder %s27, 0
      %p87 = por %p85, %p86
      %p88 = scmp.ne.s32.totalorder %s77, %s80
      %p89 = scmp.eq.s32.totalorder %s32, 1
      %p90 = por %p88, %p89
      %p91 = scmp.ne.s32.totalorder %s80, %s81
      %p92 = scmp.eq.s32.totalorder %s32, 0
      %p93 = por %p91, %p92
      %p94 = scmp.ne.s32.totalorder %s80, %s81
      %p95 = scmp.eq.s32.totalorder %s33, 1
      %p96 = por %p94, %p95
      %p98 = scmp.ne.s32.totalorder %s81, %s97
      %p99 = scmp.eq.s32.totalorder %s33, 0
      %p100 = por %p98, %p99
      %s102 = sadd.s32 %s101, 1
      %p105 = scmp.eq.s32.totalorder %s27, 1
      %p106 = scmp.ne.s32.totalorder %s101, %s103
      %p107 = scmp.eq.s32.totalorder %s27, 0
      %p108 = por %p106, %p107
      %p109 = scmp.ne.s32.totalorder %s101, %s103
      %p110 = scmp.eq.s32.totalorder %s32, 1
      %p111 = por %p109, %p110
      %p112 = scmp.ne.s32.totalorder %s103, %s104
      %p113 = scmp.eq.s32.totalorder %s32, 0
      %p114 = por %p112, %p113
      %p115 = scmp.ne.s32.totalorder %s103, %s104
      %p116 = scmp.eq.s32.totalorder %s33, 1
      %p117 = por %p115, %p116
      %p119 = scmp.ne.s32.totalorder %s104, %s118
      %p120 = scmp.eq.s32.totalorder %s33, 0
      %p121 = por %p119, %p120
      %s123 = sadd.s32 %s122, 1
      %p126 = scmp.eq.s32.totalorder %s27, 1
      %p127 = scmp.ne.s32.totalorder %s122, %s124
      %p128 = scmp.eq.s32.totalorder %s27, 0
      %p129 = por %p127, %p128
      %p130 = scmp.ne.s32.totalorder %s122, %s124
      %p131 = scmp.eq.s32.totalorder %s32, 1
      %p132 = por %p130, %p131
      %p133 = scmp.ne.s32.totalorder %s124, %s125
      %p134 = scmp.eq.s32.totalorder %s32, 0
      %p135 = por %p133, %p134
      %p136 = scmp.ne.s32.totalorder %s124, %s125
      %p137 = scmp.eq.s32.totalorder %s33, 1
      %p138 = por %p136, %p137
      %p140 = scmp.ne.s32.totalorder %s125, %s139
      %p141 = scmp.eq.s32.totalorder %s33, 0
      %p142 = por %p140, %p141
      %s144 = sadd.s32 %s143, 1
      %p147 = scmp.eq.s32.totalorder %s27, 1
      %p148 = scmp.ne.s32.totalorder %s143, %s145
      %p149 = scmp.eq.s32.totalorder %s27, 0
      %p150 = por %p148, %p149
      %p151 = scmp.ne.s32.totalorder %s143, %s145
      %p152 = scmp.eq.s32.totalorder %s32, 1
      %p153 = por %p151, %p152
      %p154 = scmp.ne.s32.totalorder %s145, %s146
      %p155 = scmp.eq.s32.totalorder %s32, 0
      %p156 = por %p154, %p155
      %p157 = scmp.ne.s32.totalorder %s145, %s146
      %p158 = scmp.eq.s32.totalorder %s33, 1
      %p159 = por %p157, %p158
      %p161 = scmp.ne.s32.totalorder %s146, %s160
      %p162 = scmp.eq.s32.totalorder %s33, 0
      %p163 = por %p161, %p162
      %s165 = sadd.s32 %s164, 1
      %p168 = scmp.eq.s32.totalorder %s27, 1
      %p169 = scmp.ne.s32.totalorder %s164, %s166
      %p170 = scmp.eq.s32.totalorder %s27, 0
      %p171 = por %p169, %p170
      %p172 = scmp.ne.s32.totalorder %s164, %s166
      %p173 = scmp.eq.s32.totalorder %s32, 1
      %p174 = por %p172, %p173
      %p175 = scmp.ne.s32.totalorder %s166, %s167
      %p176 = scmp.eq.s32.totalorder %s32, 0
      %p177 = por %p175, %p176
      %p178 = scmp.ne.s32.totalorder %s166, %s167
      %p179 = scmp.eq.s32.totalorder %s33, 1
      %p180 = por %p178, %p179
      %p182 = scmp.ne.s32.totalorder %s167, %s181
      %p183 = scmp.eq.s32.totalorder %s33, 0
      %p184 = por %p182, %p183
      %s186 = sadd.s32 %s185, 1
      %p189 = scmp.eq.s32.totalorder %s27, 1
      %p190 = scmp.ne.s32.totalorder %s185, %s187
      %p191 = scmp.eq.s32.totalorder %s27, 0
      %p192 = por %p190, %p191
      %p193 = scmp.ne.s32.totalorder %s185, %s187
      %p194 = scmp.eq.s32.totalorder %s32, 1
      %p195 = por %p193, %p194
      %p196 = scmp.ne.s32.totalorder %s187, %s188
      %p197 = scmp.eq.s32.totalorder %s32, 0
      %p198 = por %p196, %p197
      %p199 = scmp.ne.s32.totalorder %s187, %s188
      %p200 = scmp.eq.s32.totalorder %s33, 1
      %p201 = por %p199, %p200
      %p203 = scmp.ne.s32.totalorder %s188, %s202
      %p204 = scmp.eq.s32.totalorder %s33, 0
      %p205 = por %p203, %p204
      %s207 = sadd.s32 %s206, 1
      %p210 = scmp.eq.s32.totalorder %s27, 1
      %p211 = scmp.ne.s32.totalorder %s206, %s208
      %p212 = scmp.eq.s32.totalorder %s27, 0
      %p213 = por %p211, %p212
      %p214 = scmp.ne.s32.totalorder %s206, %s208
      %p215 = scmp.eq.s32.totalorder %s32, 1
      %p216 = por %p214, %p215
      %p217 = scmp.ne.s32.totalorder %s208, %s209
      %p218 = scmp.eq.s32.totalorder %s32, 0
      %p219 = por %p217, %p218
      %p220 = scmp.ne.s32.totalorder %s208, %s209
      %p221 = scmp.eq.s32.totalorder %s33, 1
      %p222 = por %p220, %p221
      %p224 = scmp.ne.s32.totalorder %s209, %s223
      %p225 = scmp.eq.s32.totalorder %s33, 0
      %p226 = por %p224, %p225
      %s228 = sadd.s32 %s227, 1
      %p231 = scmp.eq.s32.totalorder %s27, 1
      %p232 = scmp.ne.s32.totalorder %s227, %s229
      %p233 = scmp.eq.s32.totalorder %s27, 0
      %p234 = por %p232, %p233
      %p235 = scmp.ne.s32.totalorder %s227, %s229
      %p236 = scmp.eq.s32.totalorder %s32, 1
      %p237 = por %p235, %p236
      %p238 = scmp.ne.s32.totalorder %s229, %s230
      %p239 = scmp.eq.s32.totalorder %s32, 0
      %p240 = por %p238, %p239
      %p241 = scmp.ne.s32.totalorder %s229, %s230
      %p242 = scmp.eq.s32.totalorder %s33, 1
      %p243 = por %p241, %p242
      %p245 = scmp.ne.s32.totalorder %s230, %s244
      %p246 = scmp.eq.s32.totalorder %s33, 0
      %p247 = por %p245, %p246
      %s249 = sadd.s32 %s248, 1
      %p252 = scmp.eq.s32.totalorder %s27, 1
      %p253 = scmp.ne.s32.totalorder %s248, %s250
      %p254 = scmp.eq.s32.totalorder %s27, 0
      %p255 = por %p253, %p254
      %p256 = scmp.ne.s32.totalorder %s248, %s250
      %p257 = scmp.eq.s32.totalorder %s32, 1
      %p258 = por %p256, %p257
      %p259 = scmp.ne.s32.totalorder %s250, %s251
      %p260 = scmp.eq.s32.totalorder %s32, 0
      %p261 = por %p259, %p260
      %p262 = scmp.ne.s32.totalorder %s250, %s251
      %p263 = scmp.eq.s32.totalorder %s33, 1
      %p264 = por %p262, %p263
      %p266 = scmp.ne.s32.totalorder %s251, %s265
      %p267 = scmp.eq.s32.totalorder %s33, 0
      %p268 = por %p266, %p267
      %s269 = ssub.s32 %s34, %s46
      %s270 = ssub.s32 %s35, %s42
      %s271 = sor.u32 %s269, %s270
      %p272 = scmp.eq.s32.totalorder %s271, 0
      %s274 = sadd.s32 %s273, 1
      %s275 = scalar_select %p272, %s273, %s274
      %p278 = pneg %p272
      %p279 = scmp.eq.s32.totalorder %s27, 1
      %p280 = por %p278, %p279
      %p281 = scmp.ne.s32.totalorder %s273, %s276
      %p282 = scmp.eq.s32.totalorder %s27, 0
      %p283 = por %p281, %p282
      %p284 = scmp.ne.s32.totalorder %s273, %s276
      %p285 = scmp.eq.s32.totalorder %s32, 1
      %p286 = por %p284, %p285
      %p287 = scmp.ne.s32.totalorder %s276, %s277
      %p288 = scmp.eq.s32.totalorder %s32, 0
      %p289 = por %p287, %p288
      %p290 = scmp.ne.s32.totalorder %s276, %s277
      %p291 = scmp.eq.s32.totalorder %s33, 1
      %p292 = por %p290, %p291
      %p294 = scmp.ne.s32.totalorder %s277, %s293
      %p295 = scmp.eq.s32.totalorder %s33, 0
      %p296 = por %p294, %p295
      %p297 = scmp.le.s32.totalorder 1, %s27
      %p298 = scmp.lt.s32.totalorder %s27, 3
      %p299 = pnand %p297, %p298
      %p300 = pneg %p299
      // Predicated region
      $region9: #{tpu_custom_call.1} parent=5 // pred_check
        _
      $region10: #{tpu_custom_call.1} parent=5 // pred_check_branch
        %302 = sbr.rel (%p299) target = $region12
      $region11: #{tpu_custom_call.1} parent=5 // pred_region
        %s303 = ssub.s32 %s27, 1
        // Predicated region
        $region13: #{tpu_custom_call.1} parent=11 // pred_check
          %p304 = pneg %p114
        $region14: #{tpu_custom_call.1} parent=11 // pred_check_branch
          %306 = sbr.rel (%p304) target = $region16
        $region15: #{tpu_custom_call.1} parent=11 // pred_region
          %s308 = ssub.s32 512, 512
          %309 = vsyncadd [#allocation8], %s308
          %s310 = sshll.u32 [#allocation9], 4
          %s311 = int_to_ptr.vmem [resolvable:$true] %s310
          %316 = dma.hbm_to_vmem [thread:$0]  %s2, 512, %s311, [#allocation8], 128, 128, 8
        $region16: #{tpu_custom_call.1} parent=11 // pred_fallthru
          _
        // Predicated region
        $region17: #{tpu_custom_call.1} parent=11 // pred_check
          %p317 = pneg %p135
        $region18: #{tpu_custom_call.1} parent=11 // pred_check_branch
          %319 = sbr.rel (%p317) target = $region20
        $region19: #{tpu_custom_call.1} parent=11 // pred_region
          _
        $region20: #{tpu_custom_call.1} parent=11 // pred_fallthru
          _
        // Predicated region
        $region21: #{tpu_custom_call.1} parent=11 // pred_check
          %p320 = pneg %p156
        $region22: #{tpu_custom_call.1} parent=11 // pred_check_branch
          %322 = sbr.rel (%p320) target = $region24
        $region23: #{tpu_custom_call.1} parent=11 // pred_region
          %s324 = ssub.s32 512, 512
          %325 = vsyncadd [#allocation11], %s324
          %s326 = sshll.u32 [#allocation10], 4
          %s327 = int_to_ptr.vmem [resolvable:$true] %s326
          %332 = dma.hbm_to_vmem [thread:$0]  %s4, 512, %s327, [#allocation11], 128, 128, 8
        $region24: #{tpu_custom_call.1} parent=11 // pred_fallthru
          _
        // Predicated region
        $region25: #{tpu_custom_call.1} parent=11 // pred_check
          %p333 = pneg %p177
        $region26: #{tpu_custom_call.1} parent=11 // pred_check_branch
          %335 = sbr.rel (%p333) target = $region28
        $region27: #{tpu_custom_call.1} parent=11 // pred_region
          _
        $region28: #{tpu_custom_call.1} parent=11 // pred_fallthru
          _
        // Predicated region
        $region29: #{tpu_custom_call.1} parent=11 // pred_check
          %p336 = pneg %p198
        $region30: #{tpu_custom_call.1} parent=11 // pred_check_branch
          %338 = sbr.rel (%p336) target = $region32
        $region31: #{tpu_custom_call.1} parent=11 // pred_region
          %s340 = ssub.s32 512, 512
          %341 = vsyncadd [#allocation11], %s340
          %s342 = sshll.u32 [#allocation12], 4
          %s343 = int_to_ptr.vmem [resolvable:$true] %s342
          %348 = dma.hbm_to_vmem [thread:$0]  %s6, 512, %s343, [#allocation11], 128, 128, 8
        $region32: #{tpu_custom_call.1} parent=11 // pred_fallthru
          _
        // Predicated region
        $region33: #{tpu_custom_call.1} parent=11 // pred_check
          %p349 = pneg %p219
        $region34: #{tpu_custom_call.1} parent=11 // pred_check_branch
          %351 = sbr.rel (%p349) target = $region36
        $region35: #{tpu_custom_call.1} parent=11 // pred_region
          _
        $region36: #{tpu_custom_call.1} parent=11 // pred_fallthru
          _
        // Predicated region
        $region37: #{tpu_custom_call.1} parent=11 // pred_check
          %p352 = pneg %p240
        $region38: #{tpu_custom_call.1} parent=11 // pred_check_branch
          %354 = sbr.rel (%p352) target = $region40
        $region39: #{tpu_custom_call.1} parent=11 // pred_region
          %s356 = ssub.s32 512, 512
          %357 = vsyncadd [#allocation14], %s356
          %s358 = sshll.u32 [#allocation13], 4
          %s359 = int_to_ptr.vmem [resolvable:$true] %s358
          %364 = dma.hbm_to_vmem [thread:$0]  %s8, 512, %s359, [#allocation14], 128, 128, 8
        $region40: #{tpu_custom_call.1} parent=11 // pred_fallthru
          _
        // Predicated region
        $region41: #{tpu_custom_call.1} parent=11 // pred_check
          %p365 = pneg %p261
        $region42: #{tpu_custom_call.1} parent=11 // pred_check_branch
          %367 = sbr.rel (%p365) target = $region44
        $region43: #{tpu_custom_call.1} parent=11 // pred_region
          _
        $region44: #{tpu_custom_call.1} parent=11 // pred_fallthru
          _
      $region12: #{tpu_custom_call.1} parent=5 // pred_fallthru
        _
      %p368 = scmp.lt.s32.totalorder %s27, 2
      // Predicated region
      $region45: #{tpu_custom_call.1} parent=5 // pred_check
        %p369 = pneg %p368
      $region46: #{tpu_custom_call.1} parent=5 // pred_check_branch
        %371 = sbr.rel (%p369) target = $region48
      $region47: #{tpu_custom_call.1} parent=5 // pred_region
        // Predicated region
        $region49: #{tpu_custom_call.1} parent=47 // pred_check
          %p372 = pneg %p59
        $region50: #{tpu_custom_call.1} parent=47 // pred_check_branch
          %374 = sbr.rel (%p372) target = $region52
        $region51: #{tpu_custom_call.1} parent=47 // pred_region
          %s375 = sand.u32 %s49, 1
          %s376 = scalar_lea.sflag [#allocation5], %s375
          %s377 = sand.u32 %s49, 1
          %s378 = smul.addr %s377, 8
          %s379 = scalar_lea.vmem [#allocation4], %s378
          %s381 = ssub.s32 128, 128
          %382 = vsyncadd %s376, %s381
          %s383 = smul.addr %s34, 128
          %s384 = scalar_lea.hbm %s0, %s383
          %s386 = sshll.u32 %s379, 4
          %s387 = int_to_ptr.vmem [resolvable:$true] %s386
          %389 = dma.hbm_to_vmem [thread:$0]  %s384, 128, %s387, %s376
        $region52: #{tpu_custom_call.1} parent=47 // pred_fallthru
          _
        // Predicated region
        $region53: #{tpu_custom_call.1} parent=47 // pred_check
          %p390 = pneg %p87
        $region54: #{tpu_custom_call.1} parent=47 // pred_check_branch
          %392 = sbr.rel (%p390) target = $region56
        $region55: #{tpu_custom_call.1} parent=47 // pred_region
          %s393 = sand.u32 %s27, 1
          %s394 = scalar_lea.sflag [#allocation8], %s393
          %s395 = sand.u32 %s77, 1
          %s396 = smul.addr %s395, 8
          %s397 = scalar_lea.vmem [#allocation7], %s396
          %s399 = ssub.s32 128, 128
          %400 = vsyncadd %s394, %s399
          %s401 = sadd.s32 %s35, %s34
          %s402 = smul.addr %s401, 128
          %s403 = scalar_lea.hbm %s1, %s402
          %s405 = sshll.u32 %s397, 4
          %s406 = int_to_ptr.vmem [resolvable:$true] %s405
          %408 = dma.hbm_to_vmem [thread:$0]  %s403, 128, %s406, %s394
        $region56: #{tpu_custom_call.1} parent=47 // pred_fallthru
          _
      $region48: #{tpu_custom_call.1} parent=5 // pred_fallthru
        _
      %p409 = scmp.le.s32.totalorder 1, %s27
      %p410 = scmp.lt.s32.totalorder %s27, 3
      %p411 = pnand %p409, %p410
      %p412 = pneg %p411
      // Predicated region
      $region57: #{tpu_custom_call.1} parent=5 // pred_check
        _
      $region58: #{tpu_custom_call.1} parent=5 // pred_check_branch
        %414 = sbr.rel (%p411) target = $region60
      $region59: #{tpu_custom_call.1} parent=5 // pred_region
        %s415 = ssub.s32 %s27, 1
        %s416 = sand.u32 %s52, 1
        %s417 = scalar_lea.sflag [#allocation5], %s416
        %s418 = sand.u32 %s52, 1
        %s419 = smul.addr %s418, 8
        %s420 = scalar_lea.vmem [#allocation4], %s419
        // Predicated region
        $region61: #{tpu_custom_call.1} parent=59 // pred_check
          %p421 = pneg %p65
        $region62: #{tpu_custom_call.1} parent=59 // pred_check_branch
          %423 = sbr.rel (%p421) target = $region64
        $region63: #{tpu_custom_call.1} parent=59 // pred_region
          %424 = dma.done %s417, 128
        $region64: #{tpu_custom_call.1} parent=59 // pred_fallthru
          _
        %s425 = sand.u32 %s32, 1
        %s426 = scalar_lea.sflag [#allocation8], %s425
        %s427 = sand.u32 %s80, 1
        %s428 = smul.addr %s427, 8
        %s429 = scalar_lea.vmem [#allocation7], %s428
        // Predicated region
        $region65: #{tpu_custom_call.1} parent=59 // pred_check
          %p430 = pneg %p93
        $region66: #{tpu_custom_call.1} parent=59 // pred_check_branch
          %432 = sbr.rel (%p430) target = $region68
        $region67: #{tpu_custom_call.1} parent=59 // pred_region
          %433 = dma.done %s426, 128
        $region68: #{tpu_custom_call.1} parent=59 // pred_fallthru
          _
        // Predicated region
        $region69: #{tpu_custom_call.1} parent=59 // pred_check
          %p434 = pneg %p114
        $region70: #{tpu_custom_call.1} parent=59 // pred_check_branch
          %436 = sbr.rel (%p434) target = $region72
        $region71: #{tpu_custom_call.1} parent=59 // pred_region
          %437 = dma.done [#allocation8], 512
        $region72: #{tpu_custom_call.1} parent=59 // pred_fallthru
          _
        // Predicated region
        $region73: #{tpu_custom_call.1} parent=59 // pred_check
          %p438 = pneg %p156
        $region74: #{tpu_custom_call.1} parent=59 // pred_check_branch
          %440 = sbr.rel (%p438) target = $region76
        $region75: #{tpu_custom_call.1} parent=59 // pred_region
          %441 = dma.done [#allocation11], 512
        $region76: #{tpu_custom_call.1} parent=59 // pred_fallthru
          _
        // Predicated region
        $region77: #{tpu_custom_call.1} parent=59 // pred_check
          %p442 = pneg %p198
        $region78: #{tpu_custom_call.1} parent=59 // pred_check_branch
          %444 = sbr.rel (%p442) target = $region80
        $region79: #{tpu_custom_call.1} parent=59 // pred_region
          %445 = dma.done [#allocation11], 512
        $region80: #{tpu_custom_call.1} parent=59 // pred_fallthru
          _
        // Predicated region
        $region81: #{tpu_custom_call.1} parent=59 // pred_check
          %p446 = pneg %p240
        $region82: #{tpu_custom_call.1} parent=59 // pred_check_branch
          %448 = sbr.rel (%p446) target = $region84
        $region83: #{tpu_custom_call.1} parent=59 // pred_region
          %449 = dma.done [#allocation14], 512
        $region84: #{tpu_custom_call.1} parent=59 // pred_fallthru
          _
        %s450 = sand.u32 %s52, 1
        %s451 = scalar_lea.sflag [#allocation5], %s450
        %s452 = sand.u32 %s52, 1
        %s453 = smul.addr %s452, 8
        %s454 = scalar_lea.vmem [#allocation4], %s453
        %p455 = pneg %p65
        %p456 = pneg %p62
        %s457 = sand.u32 %s32, 1
        %s458 = scalar_lea.sflag [#allocation8], %s457
        %s459 = sand.u32 %s80, 1
        %s460 = smul.addr %s459, 8
        %s461 = scalar_lea.vmem [#allocation7], %s460
        %p462 = pneg %p93
        %p463 = pneg %p90
        %p464 = pneg %p114
        %p465 = pneg %p111
        %p466 = pneg %p135
        %p467 = pneg %p132
        %p468 = pneg %p156
        %p469 = pneg %p153
        %p470 = pneg %p177
        %p471 = pneg %p174
        %p472 = pneg %p198
        %p473 = pneg %p195
        %p474 = pneg %p219
        %p475 = pneg %p216
        %p476 = pneg %p240
        %p477 = pneg %p237
        %p478 = pneg %p261
        %p479 = pneg %p258
        %p480 = pneg %p289
        %p481 = pneg %p286
        %s482 = sand.u32 %s276, 1
        %s483 = scalar_lea.sflag [#allocation6], %s482
        %s484 = sand.u32 %s276, 1
        %s485 = smul.addr %s484, 8
        %s486 = scalar_lea.vmem [#allocation15], %s485
        %v487 = vld [vmem:[%s420] sm:$0xff]
        %v488 = vld [vmem:[#allocation10] sm:$0xff]
        %v489 = vld [vmem:[#allocation10 + $0x8] sm:$0xff]
        %v490 = vld [vmem:[#allocation10 + $0x10] sm:$0xff]
        %v491 = vld [vmem:[#allocation10 + $0x18] sm:$0xff]
        %v492 = vld [vmem:[%s5] sm:$0x1]
        %v494 = vlaneseq
        %v495 = vshrl.u32 %v494, 7
        %v496 = vsub.s32 0, %v495
        %v497 = vrot.slane %v492, %v496
        %vm499 = vcmask 261120
        %v501 = vsel %vm499, %v487, 0
        %503 = vmatprep.subr.mxu0 0.0
        %504 = vmatpush1.msra.mxu0 %v488
        %505 = vmatprep.subr.mxu0 0.0
        %506 = vmatpush1.msra.mxu0 %v489
        %507 = vmatprep.subr.mxu0 0.0
        %508 = vmatpush1.msra.mxu0 %v490
        %509 = vmatprep.subr.mxu0 0.0
        %510 = vmatpush1.msra.mxu0 %v491
        %511 = vmatprep.subr.mxu0 0.0
        %512 = vmatpush1.msra.mxu0 0.0
        %513 = vmatprep.subr.mxu0 0.0
        %514 = vmatpush1.msra.mxu0 0.0
        %515 = vmatprep.subr.mxu0 0.0
        %516 = vmatpush1.msra.mxu0 0.0
        %517 = vmatprep.subr.mxu0 0.0
        %518 = vmatpush1.msra.mxu0 0.0
        %519 = vmatprep.subr.mxu0 0.0
        %520 = vmatpush1.msra.mxu0 0.0
        %521 = vmatprep.subr.mxu0 0.0
        %522 = vmatpush1.msra.mxu0 0.0
        %523 = vmatprep.subr.mxu0 0.0
        %524 = vmatpush1.msra.mxu0 0.0
        %525 = vmatprep.subr.mxu0 0.0
        %526 = vmatpush1.msra.mxu0 0.0
        %527 = vmatprep.subr.mxu0 0.0
        %528 = vmatpush1.msra.mxu0 0.0
        %529 = vmatprep.subr.mxu0 0.0
        %530 = vmatpush1.msra.mxu0 0.0
        %531 = vmatprep.subr.mxu0 0.0
        %532 = vmatpush1.msra.mxu0 0.0
        %533 = vmatprep.subr.mxu0 0.0
        %534 = vmatpush1.msra.mxu0 0.0
        %535 = vmatprep.subr.mxu0 0.0
        %536 = vmatpush1.msra.mxu0 0.0
        %537 = vmatprep.subr.mxu0 0.0
        %538 = vmatpush1.msra.mxu0 0.0
        %539 = vmatprep.subr.mxu0 0.0
        %540 = vmatpush1.msra.mxu0 0.0
        %541 = vmatprep.subr.mxu0 0.0
        %542 = vmatpush1.msra.mxu0 0.0
        %543 = vmatprep.subr.mxu0 0.0
        %544 = vmatpush1.msra.mxu0 0.0
        %545 = vmatprep.subr.mxu0 0.0
        %546 = vmatpush1.msra.mxu0 0.0
        %547 = vmatprep.subr.mxu0 0.0
        %548 = vmatpush1.msra.mxu0 0.0
        %549 = vmatprep.subr.mxu0 0.0
        %550 = vmatpush1.msra.mxu0 0.0
        %551 = vmatprep.subr.mxu0 0.0
        %552 = vmatpush1.msra.mxu0 0.0
        %553 = vmatprep.subr.mxu0 0.0
        %554 = vmatpush1.msra.mxu0 0.0
        %555 = vmatprep.subr.mxu0 0.0
        %556 = vmatpush1.msra.mxu0 0.0
        %557 = vmatprep.subr.mxu0 0.0
        %558 = vmatpush1.msra.mxu0 0.0
        %559 = vmatprep.subr.mxu0 0.0
        %560 = vmatpush1.msra.mxu0 0.0
        %561 = vmatprep.subr.mxu0 0.0
        %562 = vmatpush1.msra.mxu0 0.0
        %563 = vmatprep.subr.mxu0 0.0
        %564 = vmatpush1.msra.mxu0 0.0
        %565 = vmatprep.subr.mxu0 0.0
        %566 = vmatpush1.msra.mxu0 0.0
        %567 = vmatprep.mubr.f32.mxu0 0.0
        %568 = vmatmul.mubr.f32.gmra.mrb[0].mxu0 %v501
        %v569 = vpop.f32.mrb[0].mxu0
        %v570 = vadd.f32 %v497, %v569
        %v571 = vpop.f32.mrb[0].mxu0
        %572 = vdwg.mxu0
        %v573 = vld [vmem:[#allocation12] sm:$0xff]
        %v574 = vld [vmem:[#allocation12 + $0x8] sm:$0xff]
        %v575 = vld [vmem:[#allocation12 + $0x10] sm:$0xff]
        %v576 = vld [vmem:[#allocation12 + $0x18] sm:$0xff]
        %v577 = vld [vmem:[%s7] sm:$0x1]
        %v579 = vlaneseq
        %v580 = vshrl.u32 %v579, 7
        %v581 = vsub.s32 0, %v580
        %v582 = vrot.slane %v577, %v581
        %584 = vmatprep.subr.mxu0 0.0
        %585 = vmatpush1.msra.mxu0 %v573
        %586 = vmatprep.subr.mxu0 0.0
        %587 = vmatpush1.msra.mxu0 %v574
        %588 = vmatprep.subr.mxu0 0.0
        %589 = vmatpush1.msra.mxu0 %v575
        %590 = vmatprep.subr.mxu0 0.0
        %591 = vmatpush1.msra.mxu0 %v576
        %592 = vmatprep.subr.mxu0 0.0
        %593 = vmatpush1.msra.mxu0 0.0
        %594 = vmatprep.subr.mxu0 0.0
        %595 = vmatpush1.msra.mxu0 0.0
        %596 = vmatprep.subr.mxu0 0.0
        %597 = vmatpush1.msra.mxu0 0.0
        %598 = vmatprep.subr.mxu0 0.0
        %599 = vmatpush1.msra.mxu0 0.0
        %600 = vmatprep.subr.mxu0 0.0
        %601 = vmatpush1.msra.mxu0 0.0
        %602 = vmatprep.subr.mxu0 0.0
        %603 = vmatpush1.msra.mxu0 0.0
        %604 = vmatprep.subr.mxu0 0.0
        %605 = vmatpush1.msra.mxu0 0.0
        %606 = vmatprep.subr.mxu0 0.0
        %607 = vmatpush1.msra.mxu0 0.0
        %608 = vmatprep.subr.mxu0 0.0
        %609 = vmatpush1.msra.mxu0 0.0
        %610 = vmatprep.subr.mxu0 0.0
        %611 = vmatpush1.msra.mxu0 0.0
        %612 = vmatprep.subr.mxu0 0.0
        %613 = vmatpush1.msra.mxu0 0.0
        %614 = vmatprep.subr.mxu0 0.0
        %615 = vmatpush1.msra.mxu0 0.0
        %616 = vmatprep.subr.mxu0 0.0
        %617 = vmatpush1.msra.mxu0 0.0
        %618 = vmatprep.subr.mxu0 0.0
        %619 = vmatpush1.msra.mxu0 0.0
        %620 = vmatprep.subr.mxu0 0.0
        %621 = vmatpush1.msra.mxu0 0.0
        %622 = vmatprep.subr.mxu0 0.0
        %623 = vmatpush1.msra.mxu0 0.0
        %624 = vmatprep.subr.mxu0 0.0
        %625 = vmatpush1.msra.mxu0 0.0
        %626 = vmatprep.subr.mxu0 0.0
        %627 = vmatpush1.msra.mxu0 0.0
        %628 = vmatprep.subr.mxu0 0.0
        %629 = vmatpush1.msra.mxu0 0.0
        %630 = vmatprep.subr.mxu0 0.0
        %631 = vmatpush1.msra.mxu0 0.0
        %632 = vmatprep.subr.mxu0 0.0
        %633 = vmatpush1.msra.mxu0 0.0
        %634 = vmatprep.subr.mxu0 0.0
        %635 = vmatpush1.msra.mxu0 0.0
        %636 = vmatprep.subr.mxu0 0.0
        %637 = vmatpush1.msra.mxu0 0.0
        %638 = vmatprep.subr.mxu0 0.0
        %639 = vmatpush1.msra.mxu0 0.0
        %640 = vmatprep.subr.mxu0 0.0
        %641 = vmatpush1.msra.mxu0 0.0
        %642 = vmatprep.subr.mxu0 0.0
        %643 = vmatpush1.msra.mxu0 0.0
        %644 = vmatprep.subr.mxu0 0.0
        %645 = vmatpush1.msra.mxu0 0.0
        %646 = vmatprep.subr.mxu0 0.0
        %647 = vmatpush1.msra.mxu0 0.0
        %648 = vmatprep.mubr.f32.mxu0 0.0
        %649 = vmatmul.mubr.f32.gmra.mrb[0].mxu0 %v501
        %v650 = vpop.f32.mrb[0].mxu0
        %v651 = vadd.f32 %v582, %v650
        %v652 = vpop.f32.mrb[0].mxu0
        %653 = vdwg.mxu0
        %654 = vst.msk [vmem:[#allocation2] sm:$0xff] %vm499, %v570
        %655 = vst.msk [vmem:[#allocation3] sm:$0xff] %vm499, %v651
        %v656 = vld [vmem:[%s429] sm:$0xff]
        %v657 = vld [vmem:[#allocation9] sm:$0xff]
        %v658 = vld [vmem:[#allocation9 + $0x8] sm:$0xff]
        %v659 = vld [vmem:[#allocation9 + $0x10] sm:$0xff]
        %v660 = vld [vmem:[#allocation9 + $0x18] sm:$0xff]
        %v661 = vld [vmem:[%s3] sm:$0x1]
        %v663 = vlaneseq
        %v664 = vshrl.u32 %v663, 7
        %v665 = vsub.s32 0, %v664
        %v666 = vrot.slane %v661, %v665
        %v669 = vsel %vm499, %v656, 0
        %671 = vmatprep.subr.mxu0 0.0
        %672 = vmatpush1.msra.mxu0 %v657
        %673 = vmatprep.subr.mxu0 0.0
        %674 = vmatpush1.msra.mxu0 %v658
        %675 = vmatprep.subr.mxu0 0.0
        %676 = vmatpush1.msra.mxu0 %v659
        %677 = vmatprep.subr.mxu0 0.0
        %678 = vmatpush1.msra.mxu0 %v660
        %679 = vmatprep.subr.mxu0 0.0
        %680 = vmatpush1.msra.mxu0 0.0
        %681 = vmatprep.subr.mxu0 0.0
        %682 = vmatpush1.msra.mxu0 0.0
        %683 = vmatprep.subr.mxu0 0.0
        %684 = vmatpush1.msra.mxu0 0.0
        %685 = vmatprep.subr.mxu0 0.0
        %686 = vmatpush1.msra.mxu0 0.0
        %687 = vmatprep.subr.mxu0 0.0
        %688 = vmatpush1.msra.mxu0 0.0
        %689 = vmatprep.subr.mxu0 0.0
        %690 = vmatpush1.msra.mxu0 0.0
        %691 = vmatprep.subr.mxu0 0.0
        %692 = vmatpush1.msra.mxu0 0.0
        %693 = vmatprep.subr.mxu0 0.0
        %694 = vmatpush1.msra.mxu0 0.0
        %695 = vmatprep.subr.mxu0 0.0
        %696 = vmatpush1.msra.mxu0 0.0
        %697 = vmatprep.subr.mxu0 0.0
        %698 = vmatpush1.msra.mxu0 0.0
        %699 = vmatprep.subr.mxu0 0.0
        %700 = vmatpush1.msra.mxu0 0.0
        %701 = vmatprep.subr.mxu0 0.0
        %702 = vmatpush1.msra.mxu0 0.0
        %703 = vmatprep.subr.mxu0 0.0
        %704 = vmatpush1.msra.mxu0 0.0
        %705 = vmatprep.subr.mxu0 0.0
        %706 = vmatpush1.msra.mxu0 0.0
        %707 = vmatprep.subr.mxu0 0.0
        %708 = vmatpush1.msra.mxu0 0.0
        %709 = vmatprep.subr.mxu0 0.0
        %710 = vmatpush1.msra.mxu0 0.0
        %711 = vmatprep.subr.mxu0 0.0
        %712 = vmatpush1.msra.mxu0 0.0
        %713 = vmatprep.subr.mxu0 0.0
        %714 = vmatpush1.msra.mxu0 0.0
        %715 = vmatprep.subr.mxu0 0.0
        %716 = vmatpush1.msra.mxu0 0.0
        %717 = vmatprep.subr.mxu0 0.0
        %718 = vmatpush1.msra.mxu0 0.0
        %719 = vmatprep.subr.mxu0 0.0
        %720 = vmatpush1.msra.mxu0 0.0
        %721 = vmatprep.subr.mxu0 0.0
        %722 = vmatpush1.msra.mxu0 0.0
        %723 = vmatprep.subr.mxu0 0.0
        %724 = vmatpush1.msra.mxu0 0.0
        %725 = vmatprep.subr.mxu0 0.0
        %726 = vmatpush1.msra.mxu0 0.0
        %727 = vmatprep.subr.mxu0 0.0
        %728 = vmatpush1.msra.mxu0 0.0
        %729 = vmatprep.subr.mxu0 0.0
        %730 = vmatpush1.msra.mxu0 0.0
        %731 = vmatprep.subr.mxu0 0.0
        %732 = vmatpush1.msra.mxu0 0.0
        %733 = vmatprep.subr.mxu0 0.0
        %734 = vmatpush1.msra.mxu0 0.0
        %735 = vmatprep.mubr.f32.mxu0 0.0
        %736 = vmatmul.mubr.f32.gmra.mrb[0].mxu0 %v669
        %v737 = vpop.f32.mrb[0].mxu0
        %v738 = vadd.f32 %v666, %v737
        %v739 = vpop.f32.mrb[0].mxu0
        %740 = vdwg.mxu0
        %v741 = vld [vmem:[#allocation2] sm:$0xff]
        %v743 = vsel %vm499, %v738, 0
        %v746 = vsel %vm499, %v741, 0
        %748 = vmatprep.subr.mxu0 0.0
        %749 = vmatpush1.xpose.msra.mxu0 %v746
        %750 = vmatprep.subr.mxu0 0.0
        %751 = vmatpush1.xpose.msra.mxu0 0.0
        %752 = vmatprep.subr.mxu0 0.0
        %753 = vmatpush1.xpose.msra.mxu0 0.0
        %754 = vmatprep.subr.mxu0 0.0
        %755 = vmatpush1.xpose.msra.mxu0 0.0
        %756 = vmatprep.subr.mxu0 0.0
        %757 = vmatpush1.xpose.msra.mxu0 0.0
        %758 = vmatprep.subr.mxu0 0.0
        %759 = vmatpush1.xpose.msra.mxu0 0.0
        %760 = vmatprep.subr.mxu0 0.0
        %761 = vmatpush1.xpose.msra.mxu0 0.0
        %762 = vmatprep.subr.mxu0 0.0
        %763 = vmatpush1.xpose.msra.mxu0 0.0
        %764 = vmatprep.subr.mxu0 0.0
        %765 = vmatpush1.xpose.msra.mxu0 0.0
        %766 = vmatprep.subr.mxu0 0.0
        %767 = vmatpush1.xpose.msra.mxu0 0.0
        %768 = vmatprep.subr.mxu0 0.0
        %769 = vmatpush1.xpose.msra.mxu0 0.0
        %770 = vmatprep.subr.mxu0 0.0
        %771 = vmatpush1.xpose.msra.mxu0 0.0
        %772 = vmatprep.subr.mxu0 0.0
        %773 = vmatpush1.xpose.msra.mxu0 0.0
        %774 = vmatprep.subr.mxu0 0.0
        %775 = vmatpush1.xpose.msra.mxu0 0.0
        %776 = vmatprep.subr.mxu0 0.0
        %777 = vmatpush1.xpose.msra.mxu0 0.0
        %778 = vmatprep.subr.mxu0 0.0
        %779 = vmatpush1.xpose.msra.mxu0 0.0
        %780 = vmatprep.subr.mxu0 0.0
        %781 = vmatpush1.xpose.msra.mxu0 0.0
        %782 = vmatprep.subr.mxu0 0.0
        %783 = vmatpush1.xpose.msra.mxu0 0.0
        %784 = vmatprep.subr.mxu0 0.0
        %785 = vmatpush1.xpose.msra.mxu0 0.0
        %786 = vmatprep.subr.mxu0 0.0
        %787 = vmatpush1.xpose.msra.mxu0 0.0
        %788 = vmatprep.subr.mxu0 0.0
        %789 = vmatpush1.xpose.msra.mxu0 0.0
        %790 = vmatprep.subr.mxu0 0.0
        %791 = vmatpush1.xpose.msra.mxu0 0.0
        %792 = vmatprep.subr.mxu0 0.0
        %793 = vmatpush1.xpose.msra.mxu0 0.0
        %794 = vmatprep.subr.mxu0 0.0
        %795 = vmatpush1.xpose.msra.mxu0 0.0
        %796 = vmatprep.subr.mxu0 0.0
        %797 = vmatpush1.xpose.msra.mxu0 0.0
        %798 = vmatprep.subr.mxu0 0.0
        %799 = vmatpush1.xpose.msra.mxu0 0.0
        %800 = vmatprep.subr.mxu0 0.0
        %801 = vmatpush1.xpose.msra.mxu0 0.0
        %802 = vmatprep.subr.mxu0 0.0
        %803 = vmatpush1.xpose.msra.mxu0 0.0
        %804 = vmatprep.subr.mxu0 0.0
        %805 = vmatpush1.xpose.msra.mxu0 0.0
        %806 = vmatprep.subr.mxu0 0.0
        %807 = vmatpush1.xpose.msra.mxu0 0.0
        %808 = vmatprep.subr.mxu0 0.0
        %809 = vmatpush1.xpose.msra.mxu0 0.0
        %810 = vmatprep.subr.mxu0 0.0
        %811 = vmatpush1.xpose.msra.mxu0 0.0
        %812 = vmatprep.mubr.f32.mxu0 0.0
        %813 = vmatmul.mubr.f32.gmra.mrb[0].mxu0 %v743
        %v814 = vpop.f32.mrb[0].mxu0
        %v815 = vadd.f32 0.0, %v814
        %v816 = vpop.f32.mrb[0].mxu0
        %817 = vdwg.mxu0
        %vm818 = vcmask 64512
        %v819 = vsel %vm818, %v815, -inf
        %820 = vmax.xlane.f32.xlu0 %v819
        %v821 = vpop.xlane.xlu0 %820
        %v822 = vsub.f32 %v815, %v821
        %v823 = vmul.f32 %v822, 1.442695
        %v824 = vpow.pop %v823
        %v825 = vsel %vm818, %v824, 0.0
        %826 = vadd.xlane.f32.xlu0 %v825
        %v827 = vpop.xlane.xlu0 %826
        %v828 = vld [vmem:[#allocation3] sm:$0xff]
        %v830 = vsel %vm818, %v824, 0
        %832 = vmatprep.subr.mxu0 0.0
        %833 = vmatpush1.msra.mxu0 %v828
        %834 = vmatprep.subr.mxu0 0.0
        %835 = vmatpush1.msra.mxu0 0.0
        %836 = vmatprep.subr.mxu0 0.0
        %837 = vmatpush1.msra.mxu0 0.0
        %838 = vmatprep.subr.mxu0 0.0
        %839 = vmatpush1.msra.mxu0 0.0
        %840 = vmatprep.subr.mxu0 0.0
        %841 = vmatpush1.msra.mxu0 0.0
        %842 = vmatprep.subr.mxu0 0.0
        %843 = vmatpush1.msra.mxu0 0.0
        %844 = vmatprep.subr.mxu0 0.0
        %845 = vmatpush1.msra.mxu0 0.0
        %846 = vmatprep.subr.mxu0 0.0
        %847 = vmatpush1.msra.mxu0 0.0
        %848 = vmatprep.subr.mxu0 0.0
        %849 = vmatpush1.msra.mxu0 0.0
        %850 = vmatprep.subr.mxu0 0.0
        %851 = vmatpush1.msra.mxu0 0.0
        %852 = vmatprep.subr.mxu0 0.0
        %853 = vmatpush1.msra.mxu0 0.0
        %854 = vmatprep.subr.mxu0 0.0
        %855 = vmatpush1.msra.mxu0 0.0
        %856 = vmatprep.subr.mxu0 0.0
        %857 = vmatpush1.msra.mxu0 0.0
        %858 = vmatprep.subr.mxu0 0.0
        %859 = vmatpush1.msra.mxu0 0.0
        %860 = vmatprep.subr.mxu0 0.0
        %861 = vmatpush1.msra.mxu0 0.0
        %862 = vmatprep.subr.mxu0 0.0
        %863 = vmatpush1.msra.mxu0 0.0
        %864 = vmatprep.subr.mxu0 0.0
        %865 = vmatpush1.msra.mxu0 0.0
        %866 = vmatprep.subr.mxu0 0.0
        %867 = vmatpush1.msra.mxu0 0.0
        %868 = vmatprep.subr.mxu0 0.0
        %869 = vmatpush1.msra.mxu0 0.0
        %870 = vmatprep.subr.mxu0 0.0
        %871 = vmatpush1.msra.mxu0 0.0
        %872 = vmatprep.subr.mxu0 0.0
        %873 = vmatpush1.msra.mxu0 0.0
        %874 = vmatprep.subr.mxu0 0.0
        %875 = vmatpush1.msra.mxu0 0.0
        %876 = vmatprep.subr.mxu0 0.0
        %877 = vmatpush1.msra.mxu0 0.0
        %878 = vmatprep.subr.mxu0 0.0
        %879 = vmatpush1.msra.mxu0 0.0
        %880 = vmatprep.subr.mxu0 0.0
        %881 = vmatpush1.msra.mxu0 0.0
        %882 = vmatprep.subr.mxu0 0.0
        %883 = vmatpush1.msra.mxu0 0.0
        %884 = vmatprep.subr.mxu0 0.0
        %885 = vmatpush1.msra.mxu0 0.0
        %886 = vmatprep.subr.mxu0 0.0
        %887 = vmatpush1.msra.mxu0 0.0
        %888 = vmatprep.subr.mxu0 0.0
        %889 = vmatpush1.msra.mxu0 0.0
        %890 = vmatprep.subr.mxu0 0.0
        %891 = vmatpush1.msra.mxu0 0.0
        %892 = vmatprep.subr.mxu0 0.0
        %893 = vmatpush1.msra.mxu0 0.0
        %894 = vmatprep.subr.mxu0 0.0
        %895 = vmatpush1.msra.mxu0 0.0
        %896 = vmatprep.mubr.f32.mxu0 0.0
        %897 = vmatmul.mubr.f32.gmra.mrb[0].mxu0 %v830
        %v898 = vpop.f32.mrb[0].mxu0
        %v899 = vadd.f32 0.0, %v898
        %v900 = vpop.f32.mrb[0].mxu0
        %901 = vdwg.mxu0
        %v902 = vrcp.pop %v827
        %v903 = vmul.f32 %v899, %v902
        %v904 = vld [vmem:[#allocation13] sm:$0xff]
        %v905 = vld [vmem:[#allocation13 + $0x8] sm:$0xff]
        %v906 = vld [vmem:[#allocation13 + $0x10] sm:$0xff]
        %v907 = vld [vmem:[#allocation13 + $0x18] sm:$0xff]
        %v908 = vld [vmem:[%s9] sm:$0x1]
        %v910 = vlaneseq
        %v911 = vshrl.u32 %v910, 7
        %v912 = vsub.s32 0, %v911
        %v913 = vrot.slane %v908, %v912
        %v916 = vsel %vm499, %v903, 0
        %918 = vmatprep.subr.mxu0 0.0
        %919 = vmatpush1.msra.mxu0 %v904
        %920 = vmatprep.subr.mxu0 0.0
        %921 = vmatpush1.msra.mxu0 %v905
        %922 = vmatprep.subr.mxu0 0.0
        %923 = vmatpush1.msra.mxu0 %v906
        %924 = vmatprep.subr.mxu0 0.0
        %925 = vmatpush1.msra.mxu0 %v907
        %926 = vmatprep.subr.mxu0 0.0
        %927 = vmatpush1.msra.mxu0 0.0
        %928 = vmatprep.subr.mxu0 0.0
        %929 = vmatpush1.msra.mxu0 0.0
        %930 = vmatprep.subr.mxu0 0.0
        %931 = vmatpush1.msra.mxu0 0.0
        %932 = vmatprep.subr.mxu0 0.0
        %933 = vmatpush1.msra.mxu0 0.0
        %934 = vmatprep.subr.mxu0 0.0
        %935 = vmatpush1.msra.mxu0 0.0
        %936 = vmatprep.subr.mxu0 0.0
        %937 = vmatpush1.msra.mxu0 0.0
        %938 = vmatprep.subr.mxu0 0.0
        %939 = vmatpush1.msra.mxu0 0.0
        %940 = vmatprep.subr.mxu0 0.0
        %941 = vmatpush1.msra.mxu0 0.0
        %942 = vmatprep.subr.mxu0 0.0
        %943 = vmatpush1.msra.mxu0 0.0
        %944 = vmatprep.subr.mxu0 0.0
        %945 = vmatpush1.msra.mxu0 0.0
        %946 = vmatprep.subr.mxu0 0.0
        %947 = vmatpush1.msra.mxu0 0.0
        %948 = vmatprep.subr.mxu0 0.0
        %949 = vmatpush1.msra.mxu0 0.0
        %950 = vmatprep.subr.mxu0 0.0
        %951 = vmatpush1.msra.mxu0 0.0
        %952 = vmatprep.subr.mxu0 0.0
        %953 = vmatpush1.msra.mxu0 0.0
        %954 = vmatprep.subr.mxu0 0.0
        %955 = vmatpush1.msra.mxu0 0.0
        %956 = vmatprep.subr.mxu0 0.0
        %957 = vmatpush1.msra.mxu0 0.0
        %958 = vmatprep.subr.mxu0 0.0
        %959 = vmatpush1.msra.mxu0 0.0
        %960 = vmatprep.subr.mxu0 0.0
        %961 = vmatpush1.msra.mxu0 0.0
        %962 = vmatprep.subr.mxu0 0.0
        %963 = vmatpush1.msra.mxu0 0.0
        %964 = vmatprep.subr.mxu0 0.0
        %965 = vmatpush1.msra.mxu0 0.0
        %966 = vmatprep.subr.mxu0 0.0
        %967 = vmatpush1.msra.mxu0 0.0
        %968 = vmatprep.subr.mxu0 0.0
        %969 = vmatpush1.msra.mxu0 0.0
        %970 = vmatprep.subr.mxu0 0.0
        %971 = vmatpush1.msra.mxu0 0.0
        %972 = vmatprep.subr.mxu0 0.0
        %973 = vmatpush1.msra.mxu0 0.0
        %974 = vmatprep.subr.mxu0 0.0
        %975 = vmatpush1.msra.mxu0 0.0
        %976 = vmatprep.subr.mxu0 0.0
        %977 = vmatpush1.msra.mxu0 0.0
        %978 = vmatprep.subr.mxu0 0.0
        %979 = vmatpush1.msra.mxu0 0.0
        %980 = vmatprep.subr.mxu0 0.0
        %981 = vmatpush1.msra.mxu0 0.0
        %982 = vmatprep.mubr.f32.mxu0 0.0
        %983 = vmatmul.mubr.f32.gmra.mrb[0].mxu0 %v916
        %v984 = vpop.f32.mrb[0].mxu0
        %v985 = vadd.f32 %v913, %v984
        %v986 = vpop.f32.mrb[0].mxu0
        %987 = vdwg.mxu0
        %v988 = vadd.f32 %v985, %v656
        %989 = vst.msk [vmem:[%s486] sm:$0xff] %vm499, %v988
        %s990 = sand.u32 %s276, 1
        %s991 = scalar_lea.sflag [#allocation6], %s990
        %s992 = sand.u32 %s276, 1
        %s993 = smul.addr %s992, 8
        %s994 = scalar_lea.vmem [#allocation15], %s993
        // Predicated region
        $region85: #{tpu_custom_call.1} parent=59 // pred_check
          %p995 = pneg %p286
        $region86: #{tpu_custom_call.1} parent=59 // pred_check_branch
          %997 = sbr.rel (%p995) target = $region88
        $region87: #{tpu_custom_call.1} parent=59 // pred_region
          %s999 = ssub.s32 128, 128
          %1000 = vsyncadd %s991, %s999
          %s1001 = sadd.s32 %s37, %s36
          %s1002 = smul.addr %s1001, 128
          %s1003 = scalar_lea.hbm %s10, %s1002
          %s1005 = sshll.u32 %s994, 4
          %s1006 = int_to_ptr.vmem [resolvable:$true] %s1005
          %1008 = dma.vmem_to_hbm [thread:$0]  %s1006, 128, %s1003, %s991
        $region88: #{tpu_custom_call.1} parent=59 // pred_fallthru
          _
      $region60: #{tpu_custom_call.1} parent=5 // pred_fallthru
        _
      %p1009 = scmp.le.s32.totalorder 2, %s27
      // Predicated region
      $region89: #{tpu_custom_call.1} parent=5 // pred_check
        %p1010 = pneg %p1009
      $region90: #{tpu_custom_call.1} parent=5 // pred_check_branch
        %1012 = sbr.rel (%p1010) target = $region92
      $region91: #{tpu_custom_call.1} parent=5 // pred_region
        %s1013 = ssub.s32 %s27, 2
        // Predicated region
        $region93: #{tpu_custom_call.1} parent=91 // pred_check
          %p1014 = pneg %p292
        $region94: #{tpu_custom_call.1} parent=91 // pred_check_branch
          %1016 = sbr.rel (%p1014) target = $region96
        $region95: #{tpu_custom_call.1} parent=91 // pred_region
          %s1017 = sand.u32 %s277, 1
          %s1018 = scalar_lea.sflag [#allocation6], %s1017
          %s1019 = sand.u32 %s277, 1
          %s1020 = smul.addr %s1019, 8
          %s1021 = scalar_lea.vmem [#allocation15], %s1020
          %1022 = dma.done %s1018, 128
        $region96: #{tpu_custom_call.1} parent=91 // pred_fallthru
          _
      $region92: #{tpu_custom_call.1} parent=5 // pred_fallthru
        _
    $region6: #{tpu_custom_call.1} parent=1 // loop_footer
      %s31 = sadd.s32 1, %s27
    $region7: #{tpu_custom_call.1} parent=1 // loop_footer_branch
      %26 = sbr.rel target = $region3
    $region8: #{tpu_custom_call.1} parent=1 // loop_exit
      _
    %1023 = vsyncpa [#allocation5], 1
    %s1024 = scalar_lea.sflag [#allocation5], 1
    %1025 = vsyncpa %s1024, 1
    %1026 = vsyncpa [#allocation8], 1
    %s1027 = scalar_lea.sflag [#allocation8], 1
    %1028 = vsyncpa %s1027, 1
    %1029 = vsyncpa [#allocation11], 1
    %1030 = vsyncpa [#allocation14], 1
    %1031 = vsyncpa [#allocation6], 1
    %s1032 = scalar_lea.sflag [#allocation6], 1
    %1033 = vsyncpa %s1032, 1

// kernel: tpu_custom_call.1
$region0: #{tpu_custom_call.1}
  #allocation0 [shape = 'u32[]', space=smem, size = 0x4, offset = 0x4, fixed_abs, tag = 'smem constant byte address 0x4 - core index']
  #allocation1 [shape = 'u32[144,128]{1,0:T(1,128)}', space=vmem, size = 0x12000, scoped, tag = 'internal scratch']
  #allocation2 [shape = 'f32[8,32]{1,0:T(8,128)}', space=vmem, size = 0x1000, scoped, tag = 'scratch operand']
  #allocation3 [shape = 'f32[8,32]{1,0:T(8,128)}', space=vmem, size = 0x1000, scoped, tag = 'scratch operand']
  %s0 = inlined_call_operand.hbm [shape: f32[2,8,32], index: 0, kind: input, shape index: {}]
  %s1 = inlined_call_operand.hbm [shape: f32[2,8,32], index: 1, kind: input, shape index: {}]
  %s2 = inlined_call_operand.hbm [shape: f32[32,32], index: 2, kind: input, shape index: {}]
  %s3 = inlined_call_operand.vmem [shape: f32[1,32], index: 3, kind: input, shape index: {}]
  %s4 = inlined_call_operand.hbm [shape: f32[32,32], index: 4, kind: input, shape index: {}]
  %s5 = inlined_call_operand.vmem [shape: f32[1,32], index: 5, kind: input, shape index: {}]
  %s6 = inlined_call_operand.hbm [shape: f32[32,32], index: 6, kind: input, shape index: {}]
  %s7 = inlined_call_operand.vmem [shape: f32[1,32], index: 7, kind: input, shape index: {}]
  %s8 = inlined_call_operand.hbm [shape: f32[32,32], index: 8, kind: input, shape index: {}]
  %s9 = inlined_call_operand.vmem [shape: f32[1,32], index: 9, kind: input, shape index: {}]
  %s10 = inlined_call_operand.hbm [shape: f32[2,8,32], index: 10, kind: output, shape index: {}]
  %s11 = sld [smem:[#allocation0]]
  $region97: #{tpu_custom_call.1} parent=0
    _
  %s13 = ssub.s32 1, %s11
  %s14 = scalar_select 0, %s13, %s11
  $region1: #{tpu_custom_call.1} parent=0
    #allocation4 [shape = 'u8[8192]{0}', space=vmem, size = 0x2000, scoped, tag = 'input window, operand 0']
    #allocation5 [shape = 's32[2]{0}', space=sflag, size = 0x8, scoped, tag = 'scoped memory for tpu_custom_call.1']
    #allocation6 [shape = 's32[2]{0}', space=sflag, size = 0x8, scoped, tag = 'scoped memory for tpu_custom_call.1']
    #allocation7 [shape = 'u8[8192]{0}', space=vmem, size = 0x2000, scoped, tag = 'input window, operand 1']
    #allocation8 [shape = 's32[2]{0}', space=sflag, size = 0x8, scoped, tag = 'scoped memory for tpu_custom_call.1']
    #allocation9 [shape = 'u8[16384]{0}', space=vmem, size = 0x4000, scoped, tag = 'input window, operand 2, single buffered']
    #allocation10 [shape = 'u8[16384]{0}', space=vmem, size = 0x4000, scoped, tag = 'input window, operand 4, single buffered']
    #allocation11 [shape = 's32[1]{0}', space=sflag, size = 0x4, scoped, tag = 'scoped memory for tpu_custom_call.1']
    #allocation12 [shape = 'u8[16384]{0}', space=vmem, size = 0x4000, scoped, tag = 'input window, operand 6, single buffered']
    #allocation13 [shape = 'u8[16384]{0}', space=vmem, size = 0x4000, scoped, tag = 'input window, operand 8, single buffered']
    #allocation14 [shape = 's32[1]{0}', space=sflag, size = 0x4, scoped, tag = 'scoped memory for tpu_custom_call.1']
    #allocation15 [shape = 'u8[8192]{0}', space=vmem, size = 0x2000, scoped, tag = 'output window, operand 0']
    %15 = vsyncpa [#allocation5], 0
    %s16 = scalar_lea.sflag [#allocation5], 1
    %17 = vsyncpa %s16, 0
    %18 = vsyncpa [#allocation8], 0
    %s19 = scalar_lea.sflag [#allocation8], 1
    %20 = vsyncpa %s19, 0
    %21 = vsyncpa [#allocation11], 0
    %22 = vsyncpa [#allocation14], 0
    %23 = vsyncpa [#allocation6], 0
    %s24 = scalar_lea.sflag [#allocation6], 1
    %25 = vsyncpa %s24, 0
    loop: start=0, step=1, limit=4
    $region2: #{tpu_custom_call.1} parent=1 // loop_pre_header
      _
    $region3: #{tpu_custom_call.1} parent=1 // loop_header
      %s27 = sphi 0, %s31
      %p28 = scmp.ge.s32.totalorder %s27, 4
      %s34 = sphi 0, %s46
      %s35 = sphi 0, %s42
      %s36 = sphi 0, %s34
      %s37 = sphi 0, %s35
      %s38 = sphi 0, %s36
      %s39 = sphi 0, %s37
      %s49 = sphi 0, %s51
      %s52 = sphi 0, %s49
      %s53 = sphi 0, %s52
      %s69 = sphi 0, %s53
      %s77 = sphi 0, %s79
      %s80 = sphi 0, %s77
      %s81 = sphi 0, %s80
      %s97 = sphi 0, %s81
      %s101 = sphi 0, %s101
      %s103 = sphi 0, %s101
      %s104 = sphi 0, %s103
      %s118 = sphi 0, %s104
      %s122 = sphi 0, %s122
      %s124 = sphi 0, %s122
      %s125 = sphi 0, %s124
      %s139 = sphi 0, %s125
      %s143 = sphi 0, %s143
      %s145 = sphi 0, %s143
      %s146 = sphi 0, %s145
      %s160 = sphi 0, %s146
      %s164 = sphi 0, %s164
      %s166 = sphi 0, %s164
      %s167 = sphi 0, %s166
      %s181 = sphi 0, %s167
      %s185 = sphi 0, %s185
      %s187 = sphi 0, %s185
      %s188 = sphi 0, %s187
      %s202 = sphi 0, %s188
      %s206 = sphi 0, %s206
      %s208 = sphi 0, %s206
      %s209 = sphi 0, %s208
      %s223 = sphi 0, %s209
      %s227 = sphi 0, %s227
      %s229 = sphi 0, %s227
      %s230 = sphi 0, %s229
      %s244 = sphi 0, %s230
      %s248 = sphi 0, %s248
      %s250 = sphi 0, %s248
      %s251 = sphi 0, %s250
      %s265 = sphi 0, %s251
      %s273 = sphi 0, %s275
      %s276 = sphi 0, %s273
      %s277 = sphi 0, %s276
      %s293 = sphi 0, %s277
    $region4: #{tpu_custom_call.1} parent=1 // loop_header_branch
      %30 = sbr.rel (%p28) target = $region8
    $region5: #{tpu_custom_call.1} parent=1 // loop_body
      %s32 = ssub.s32 %s27, 1
      %s33 = ssub.s32 %s27, 2
      %s40 = sadd.s32 1, %s35
      %p41 = scmp.ge.s32.totalorder %s40, 1
      %s42 = scalar_select %p41, 0, %s40
      %s43 = sadd.s32 1, %s34
      %s44 = scalar_select %p41, %s43, %s34
      %p45 = scmp.ge.s32.totalorder %s44, 2
      %s46 = scalar_select %p45, 0, %s44
      %s47 = ssub.s32 %s34, %s46
      %p48 = scmp.eq.s32.totalorder %s47, 0
      %s50 = sadd.s32 %s49, 1
      %s51 = scalar_select %p48, %s49, %s50
      %p54 = pneg %p48
      %p55 = scmp.eq.s32.totalorder %s27, 1
      %p56 = por %p54, %p55
      %p57 = scmp.ne.s32.totalorder %s49, %s52
      %p58 = scmp.eq.s32.totalorder %s27, 0
      %p59 = por %p57, %p58
      %p60 = scmp.ne.s32.totalorder %s49, %s52
      %p61 = scmp.eq.s32.totalorder %s32, 1
      %p62 = por %p60, %p61
      %p63 = scmp.ne.s32.totalorder %s52, %s53
      %p64 = scmp.eq.s32.totalorder %s32, 0
      %p65 = por %p63, %p64
      %p66 = scmp.ne.s32.totalorder %s52, %s53
      %p67 = scmp.eq.s32.totalorder %s33, 1
      %p68 = por %p66, %p67
      %p70 = scmp.ne.s32.totalorder %s53, %s69
      %p71 = scmp.eq.s32.totalorder %s33, 0
      %p72 = por %p70, %p71
      %s73 = ssub.s32 %s34, %s46
      %s74 = ssub.s32 %s35, %s42
      %s75 = sor.u32 %s73, %s74
      %p76 = scmp.eq.s32.totalorder %s75, 0
      %s78 = sadd.s32 %s77, 1
      %s79 = scalar_select %p76, %s77, %s78
      %p82 = pneg %p76
      %p83 = scmp.eq.s32.totalorder %s27, 1
      %p84 = por %p82, %p83
      %p85 = scmp.ne.s32.totalorder %s77, %s80
      %p86 = scmp.eq.s32.totalorder %s27, 0
      %p87 = por %p85, %p86
      %p88 = scmp.ne.s32.totalorder %s77, %s80
      %p89 = scmp.eq.s32.totalorder %s32, 1
      %p90 = por %p88, %p89
      %p91 = scmp.ne.s32.totalorder %s80, %s81
      %p92 = scmp.eq.s32.totalorder %s32, 0
      %p93 = por %p91, %p92
      %p94 = scmp.ne.s32.totalorder %s80, %s81
      %p95 = scmp.eq.s32.totalorder %s33, 1
      %p96 = por %p94, %p95
      %p98 = scmp.ne.s32.totalorder %s81, %s97
      %p99 = scmp.eq.s32.totalorder %s33, 0
      %p100 = por %p98, %p99
      %s102 = sadd.s32 %s101, 1
      %p105 = scmp.eq.s32.totalorder %s27, 1
      %p106 = scmp.ne.s32.totalorder %s101, %s103
      %p107 = scmp.eq.s32.totalorder %s27, 0
      %p108 = por %p106, %p107
      %p109 = scmp.ne.s32.totalorder %s101, %s103
      %p110 = scmp.eq.s32.totalorder %s32, 1
      %p111 = por %p109, %p110
      %p112 = scmp.ne.s32.totalorder %s103, %s104
      %p113 = scmp.eq.s32.totalorder %s32, 0
      %p114 = por %p112, %p113
      %p115 = scmp.ne.s32.totalorder %s103, %s104
      %p116 = scmp.eq.s32.totalorder %s33, 1
      %p117 = por %p115, %p116
      %p119 = scmp.ne.s32.totalorder %s104, %s118
      %p120 = scmp.eq.s32.totalorder %s33, 0
      %p121 = por %p119, %p120
      %s123 = sadd.s32 %s122, 1
      %p126 = scmp.eq.s32.totalorder %s27, 1
      %p127 = scmp.ne.s32.totalorder %s122, %s124
      %p128 = scmp.eq.s32.totalorder %s27, 0
      %p129 = por %p127, %p128
      %p130 = scmp.ne.s32.totalorder %s122, %s124
      %p131 = scmp.eq.s32.totalorder %s32, 1
      %p132 = por %p130, %p131
      %p133 = scmp.ne.s32.totalorder %s124, %s125
      %p134 = scmp.eq.s32.totalorder %s32, 0
      %p135 = por %p133, %p134
      %p136 = scmp.ne.s32.totalorder %s124, %s125
      %p137 = scmp.eq.s32.totalorder %s33, 1
      %p138 = por %p136, %p137
      %p140 = scmp.ne.s32.totalorder %s125, %s139
      %p141 = scmp.eq.s32.totalorder %s33, 0
      %p142 = por %p140, %p141
      %s144 = sadd.s32 %s143, 1
      %p147 = scmp.eq.s32.totalorder %s27, 1
      %p148 = scmp.ne.s32.totalorder %s143, %s145
      %p149 = scmp.eq.s32.totalorder %s27, 0
      %p150 = por %p148, %p149
      %p151 = scmp.ne.s32.totalorder %s143, %s145
      %p152 = scmp.eq.s32.totalorder %s32, 1
      %p153 = por %p151, %p152
      %p154 = scmp.ne.s32.totalorder %s145, %s146
      %p155 = scmp.eq.s32.totalorder %s32, 0
      %p156 = por %p154, %p155
      %p157 = scmp.ne.s32.totalorder %s145, %s146
      %p158 = scmp.eq.s32.totalorder %s33, 1
      %p159 = por %p157, %p158
      %p161 = scmp.ne.s32.totalorder %s146, %s160
      %p162 = scmp.eq.s32.totalorder %s33, 0
      %p163 = por %p161, %p162
      %s165 = sadd.s32 %s164, 1
      %p168 = scmp.eq.s32.totalorder %s27, 1
      %p169 = scmp.ne.s32.totalorder %s164, %s166
      %p170 = scmp.eq.s32.totalorder %s27, 0
      %p171 = por %p169, %p170
      %p172 = scmp.ne.s32.totalorder %s164, %s166
      %p173 = scmp.eq.s32.totalorder %s32, 1
      %p174 = por %p172, %p173
      %p175 = scmp.ne.s32.totalorder %s166, %s167
      %p176 = scmp.eq.s32.totalorder %s32, 0
      %p177 = por %p175, %p176
      %p178 = scmp.ne.s32.totalorder %s166, %s167
      %p179 = scmp.eq.s32.totalorder %s33, 1
      %p180 = por %p178, %p179
      %p182 = scmp.ne.s32.totalorder %s167, %s181
      %p183 = scmp.eq.s32.totalorder %s33, 0
      %p184 = por %p182, %p183
      %s186 = sadd.s32 %s185, 1
      %p189 = scmp.eq.s32.totalorder %s27, 1
      %p190 = scmp.ne.s32.totalorder %s185, %s187
      %p191 = scmp.eq.s32.totalorder %s27, 0
      %p192 = por %p190, %p191
      %p193 = scmp.ne.s32.totalorder %s185, %s187
      %p194 = scmp.eq.s32.totalorder %s32, 1
      %p195 = por %p193, %p194
      %p196 = scmp.ne.s32.totalorder %s187, %s188
      %p197 = scmp.eq.s32.totalorder %s32, 0
      %p198 = por %p196, %p197
      %p199 = scmp.ne.s32.totalorder %s187, %s188
      %p200 = scmp.eq.s32.totalorder %s33, 1
      %p201 = por %p199, %p200
      %p203 = scmp.ne.s32.totalorder %s188, %s202
      %p204 = scmp.eq.s32.totalorder %s33, 0
      %p205 = por %p203, %p204
      %s207 = sadd.s32 %s206, 1
      %p210 = scmp.eq.s32.totalorder %s27, 1
      %p211 = scmp.ne.s32.totalorder %s206, %s208
      %p212 = scmp.eq.s32.totalorder %s27, 0
      %p213 = por %p211, %p212
      %p214 = scmp.ne.s32.totalorder %s206, %s208
      %p215 = scmp.eq.s32.totalorder %s32, 1
      %p216 = por %p214, %p215
      %p217 = scmp.ne.s32.totalorder %s208, %s209
      %p218 = scmp.eq.s32.totalorder %s32, 0
      %p219 = por %p217, %p218
      %p220 = scmp.ne.s32.totalorder %s208, %s209
      %p221 = scmp.eq.s32.totalorder %s33, 1
      %p222 = por %p220, %p221
      %p224 = scmp.ne.s32.totalorder %s209, %s223
      %p225 = scmp.eq.s32.totalorder %s33, 0
      %p226 = por %p224, %p225
      %s228 = sadd.s32 %s227, 1
      %p231 = scmp.eq.s32.totalorder %s27, 1
      %p232 = scmp.ne.s32.totalorder %s227, %s229
      %p233 = scmp.eq.s32.totalorder %s27, 0
      %p234 = por %p232, %p233
      %p235 = scmp.ne.s32.totalorder %s227, %s229
      %p236 = scmp.eq.s32.totalorder %s32, 1
      %p237 = por %p235, %p236
      %p238 = scmp.ne.s32.totalorder %s229, %s230
      %p239 = scmp.eq.s32.totalorder %s32, 0
      %p240 = por %p238, %p239
      %p241 = scmp.ne.s32.totalorder %s229, %s230
      %p242 = scmp.eq.s32.totalorder %s33, 1
      %p243 = por %p241, %p242
      %p245 = scmp.ne.s32.totalorder %s230, %s244
      %p246 = scmp.eq.s32.totalorder %s33, 0
      %p247 = por %p245, %p246
      %s249 = sadd.s32 %s248, 1
      %p252 = scmp.eq.s32.totalorder %s27, 1
      %p253 = scmp.ne.s32.totalorder %s248, %s250
      %p254 = scmp.eq.s32.totalorder %s27, 0
      %p255 = por %p253, %p254
      %p256 = scmp.ne.s32.totalorder %s248, %s250
      %p257 = scmp.eq.s32.totalorder %s32, 1
      %p258 = por %p256, %p257
      %p259 = scmp.ne.s32.totalorder %s250, %s251
      %p260 = scmp.eq.s32.totalorder %s32, 0
      %p261 = por %p259, %p260
      %p262 = scmp.ne.s32.totalorder %s250, %s251
      %p263 = scmp.eq.s32.totalorder %s33, 1
      %p264 = por %p262, %p263
      %p266 = scmp.ne.s32.totalorder %s251, %s265
      %p267 = scmp.eq.s32.totalorder %s33, 0
      %p268 = por %p266, %p267
      %s269 = ssub.s32 %s34, %s46
      %s270 = ssub.s32 %s35, %s42
      %s271 = sor.u32 %s269, %s270
      %p272 = scmp.eq.s32.totalorder %s271, 0
      %s274 = sadd.s32 %s273, 1
      %s275 = scalar_select %p272, %s273, %s274
      %p278 = pneg %p272
      %p279 = scmp.eq.s32.totalorder %s27, 1
      %p280 = por %p278, %p279
      %p281 = scmp.ne.s32.totalorder %s273, %s276
      %p282 = scmp.eq.s32.totalorder %s27, 0
      %p283 = por %p281, %p282
      %p284 = scmp.ne.s32.totalorder %s273, %s276
      %p285 = scmp.eq.s32.totalorder %s32, 1
      %p286 = por %p284, %p285
      %p287 = scmp.ne.s32.totalorder %s276, %s277
      %p288 = scmp.eq.s32.totalorder %s32, 0
      %p289 = por %p287, %p288
      %p290 = scmp.ne.s32.totalorder %s276, %s277
      %p291 = scmp.eq.s32.totalorder %s33, 1
      %p292 = por %p290, %p291
      %p294 = scmp.ne.s32.totalorder %s277, %s293
      %p295 = scmp.eq.s32.totalorder %s33, 0
      %p296 = por %p294, %p295
      %p297 = scmp.le.s32.totalorder 1, %s27
      %p298 = scmp.lt.s32.totalorder %s27, 3
      %p299 = pnand %p297, %p298
      %p300 = pneg %p299
      // Predicated region
      $region9: #{tpu_custom_call.1} parent=5 // pred_check
        _
      $region10: #{tpu_custom_call.1} parent=5 // pred_check_branch
        %302 = sbr.rel (%p299) target = $region12
      $region11: #{tpu_custom_call.1} parent=5 // pred_region
        %s303 = ssub.s32 %s27, 1
        // Predicated region
        $region13: #{tpu_custom_call.1} parent=11 // pred_check
          %p304 = pneg %p114
        $region14: #{tpu_custom_call.1} parent=11 // pred_check_branch
          %306 = sbr.rel (%p304) target = $region16
        $region15: #{tpu_custom_call.1} parent=11 // pred_region
          %s308 = ssub.s32 512, 512
          %309 = vsyncadd [#allocation8], %s308
          %s310 = sshll.u32 [#allocation9], 4
          %s311 = int_to_ptr.vmem [resolvable:$true] %s310
          %316 = dma.hbm_to_vmem [thread:$0]  %s2, 512, %s311, [#allocation8], 128, 128, 8
        $region16: #{tpu_custom_call.1} parent=11 // pred_fallthru
          _
        // Predicated region
        $region17: #{tpu_custom_call.1} parent=11 // pred_check
          %p317 = pneg %p135
        $region18: #{tpu_custom_call.1} parent=11 // pred_check_branch
          %319 = sbr.rel (%p317) target = $region20
        $region19: #{tpu_custom_call.1} parent=11 // pred_region
          _
        $region20: #{tpu_custom_call.1} parent=11 // pred_fallthru
          _
        // Predicated region
        $region21: #{tpu_custom_call.1} parent=11 // pred_check
          %p320 = pneg %p156
        $region22: #{tpu_custom_call.1} parent=11 // pred_check_branch
          %322 = sbr.rel (%p320) target = $region24
        $region23: #{tpu_custom_call.1} parent=11 // pred_region
          %s324 = ssub.s32 512, 512
          %325 = vsyncadd [#allocation11], %s324
          %s326 = sshll.u32 [#allocation10], 4
          %s327 = int_to_ptr.vmem [resolvable:$true] %s326
          %332 = dma.hbm_to_vmem [thread:$0]  %s4, 512, %s327, [#allocation11], 128, 128, 8
        $region24: #{tpu_custom_call.1} parent=11 // pred_fallthru
          _
        // Predicated region
        $region25: #{tpu_custom_call.1} parent=11 // pred_check
          %p333 = pneg %p177
        $region26: #{tpu_custom_call.1} parent=11 // pred_check_branch
          %335 = sbr.rel (%p333) target = $region28
        $region27: #{tpu_custom_call.1} parent=11 // pred_region
          _
        $region28: #{tpu_custom_call.1} parent=11 // pred_fallthru
          _
        // Predicated region
        $region29: #{tpu_custom_call.1} parent=11 // pred_check
          %p336 = pneg %p198
        $region30: #{tpu_custom_call.1} parent=11 // pred_check_branch
          %338 = sbr.rel (%p336) target = $region32
        $region31: #{tpu_custom_call.1} parent=11 // pred_region
          %s340 = ssub.s32 512, 512
          %341 = vsyncadd [#allocation11], %s340
          %s342 = sshll.u32 [#allocation12], 4
          %s343 = int_to_ptr.vmem [resolvable:$true] %s342
          %348 = dma.hbm_to_vmem [thread:$0]  %s6, 512, %s343, [#allocation11], 128, 128, 8
        $region32: #{tpu_custom_call.1} parent=11 // pred_fallthru
          _
        // Predicated region
        $region33: #{tpu_custom_call.1} parent=11 // pred_check
          %p349 = pneg %p219
        $region34: #{tpu_custom_call.1} parent=11 // pred_check_branch
          %351 = sbr.rel (%p349) target = $region36
        $region35: #{tpu_custom_call.1} parent=11 // pred_region
          _
        $region36: #{tpu_custom_call.1} parent=11 // pred_fallthru
          _
        // Predicated region
        $region37: #{tpu_custom_call.1} parent=11 // pred_check
          %p352 = pneg %p240
        $region38: #{tpu_custom_call.1} parent=11 // pred_check_branch
          %354 = sbr.rel (%p352) target = $region40
        $region39: #{tpu_custom_call.1} parent=11 // pred_region
          %s356 = ssub.s32 512, 512
          %357 = vsyncadd [#allocation14], %s356
          %s358 = sshll.u32 [#allocation13], 4
          %s359 = int_to_ptr.vmem [resolvable:$true] %s358
          %364 = dma.hbm_to_vmem [thread:$0]  %s8, 512, %s359, [#allocation14], 128, 128, 8
        $region40: #{tpu_custom_call.1} parent=11 // pred_fallthru
          _
        // Predicated region
        $region41: #{tpu_custom_call.1} parent=11 // pred_check
          %p365 = pneg %p261
        $region42: #{tpu_custom_call.1} parent=11 // pred_check_branch
          %367 = sbr.rel (%p365) target = $region44
        $region43: #{tpu_custom_call.1} parent=11 // pred_region
          _
        $region44: #{tpu_custom_call.1} parent=11 // pred_fallthru
          _
      $region12: #{tpu_custom_call.1} parent=5 // pred_fallthru
        _
      %p368 = scmp.lt.s32.totalorder %s27, 2
      // Predicated region
      $region45: #{tpu_custom_call.1} parent=5 // pred_check
        %p369 = pneg %p368
      $region46: #{tpu_custom_call.1} parent=5 // pred_check_branch
        %371 = sbr.rel (%p369) target = $region48
      $region47: #{tpu_custom_call.1} parent=5 // pred_region
        // Predicated region
        $region49: #{tpu_custom_call.1} parent=47 // pred_check
          %p372 = pneg %p59
        $region50: #{tpu_custom_call.1} parent=47 // pred_check_branch
          %374 = sbr.rel (%p372) target = $region52
        $region51: #{tpu_custom_call.1} parent=47 // pred_region
          %s375 = sand.u32 %s49, 1
          %s376 = scalar_lea.sflag [#allocation5], %s375
          %s377 = sand.u32 %s49, 1
          %s378 = smul.addr %s377, 8
          %s379 = scalar_lea.vmem [#allocation4], %s378
          %s381 = ssub.s32 128, 128
          %382 = vsyncadd %s376, %s381
          %s383 = smul.addr %s34, 128
          %s384 = scalar_lea.hbm %s0, %s383
          %s386 = sshll.u32 %s379, 4
          %s387 = int_to_ptr.vmem [resolvable:$true] %s386
          %389 = dma.hbm_to_vmem [thread:$0]  %s384, 128, %s387, %s376
        $region52: #{tpu_custom_call.1} parent=47 // pred_fallthru
          _
        // Predicated region
        $region53: #{tpu_custom_call.1} parent=47 // pred_check
          %p390 = pneg %p87
        $region54: #{tpu_custom_call.1} parent=47 // pred_check_branch
          %392 = sbr.rel (%p390) target = $region56
        $region55: #{tpu_custom_call.1} parent=47 // pred_region
          %s393 = sand.u32 %s27, 1
          %s394 = scalar_lea.sflag [#allocation8], %s393
          %s395 = sand.u32 %s77, 1
          %s396 = smul.addr %s395, 8
          %s397 = scalar_lea.vmem [#allocation7], %s396
          %s399 = ssub.s32 128, 128
          %400 = vsyncadd %s394, %s399
          %s401 = sadd.s32 %s35, %s34
          %s402 = smul.addr %s401, 128
          %s403 = scalar_lea.hbm %s1, %s402
          %s405 = sshll.u32 %s397, 4
          %s406 = int_to_ptr.vmem [resolvable:$true] %s405
          %408 = dma.hbm_to_vmem [thread:$0]  %s403, 128, %s406, %s394
        $region56: #{tpu_custom_call.1} parent=47 // pred_fallthru
          _
      $region48: #{tpu_custom_call.1} parent=5 // pred_fallthru
        _
      %p409 = scmp.le.s32.totalorder 1, %s27
      %p410 = scmp.lt.s32.totalorder %s27, 3
      %p411 = pnand %p409, %p410
      %p412 = pneg %p411
      // Predicated region
      $region57: #{tpu_custom_call.1} parent=5 // pred_check
        _
      $region58: #{tpu_custom_call.1} parent=5 // pred_check_branch
        %414 = sbr.rel (%p411) target = $region60
      $region59: #{tpu_custom_call.1} parent=5 // pred_region
        %s415 = ssub.s32 %s27, 1
        %s416 = sand.u32 %s52, 1
        %s417 = scalar_lea.sflag [#allocation5], %s416
        %s418 = sand.u32 %s52, 1
        %s419 = smul.addr %s418, 8
        %s420 = scalar_lea.vmem [#allocation4], %s419
        // Predicated region
        $region61: #{tpu_custom_call.1} parent=59 // pred_check
          %p421 = pneg %p65
        $region62: #{tpu_custom_call.1} parent=59 // pred_check_branch
          %423 = sbr.rel (%p421) target = $region64
        $region63: #{tpu_custom_call.1} parent=59 // pred_region
          %424 = dma.done %s417, 128
        $region64: #{tpu_custom_call.1} parent=59 // pred_fallthru
          _
        %s425 = sand.u32 %s32, 1
        %s426 = scalar_lea.sflag [#allocation8], %s425
        %s427 = sand.u32 %s80, 1
        %s428 = smul.addr %s427, 8
        %s429 = scalar_lea.vmem [#allocation7], %s428
        // Predicated region
        $region65: #{tpu_custom_call.1} parent=59 // pred_check
          %p430 = pneg %p93
        $region66: #{tpu_custom_call.1} parent=59 // pred_check_branch
          %432 = sbr.rel (%p430) target = $region68
        $region67: #{tpu_custom_call.1} parent=59 // pred_region
          %433 = dma.done %s426, 128
        $region68: #{tpu_custom_call.1} parent=59 // pred_fallthru
          _
        // Predicated region
        $region69: #{tpu_custom_call.1} parent=59 // pred_check
          %p434 = pneg %p114
        $region70: #{tpu_custom_call.1} parent=59 // pred_check_branch
          %436 = sbr.rel (%p434) target = $region72
        $region71: #{tpu_custom_call.1} parent=59 // pred_region
          %437 = dma.done [#allocation8], 512
        $region72: #{tpu_custom_call.1} parent=59 // pred_fallthru
          _
        // Predicated region
        $region73: #{tpu_custom_call.1} parent=59 // pred_check
          %p438 = pneg %p156
        $region74: #{tpu_custom_call.1} parent=59 // pred_check_branch
          %440 = sbr.rel (%p438) target = $region76
        $region75: #{tpu_custom_call.1} parent=59 // pred_region
          %441 = dma.done [#allocation11], 512
        $region76: #{tpu_custom_call.1} parent=59 // pred_fallthru
          _
        // Predicated region
        $region77: #{tpu_custom_call.1} parent=59 // pred_check
          %p442 = pneg %p198
        $region78: #{tpu_custom_call.1} parent=59 // pred_check_branch
          %444 = sbr.rel (%p442) target = $region80
        $region79: #{tpu_custom_call.1} parent=59 // pred_region
          %445 = dma.done [#allocation11], 512
        $region80: #{tpu_custom_call.1} parent=59 // pred_fallthru
          _
        // Predicated region
        $region81: #{tpu_custom_call.1} parent=59 // pred_check
          %p446 = pneg %p240
        $region82: #{tpu_custom_call.1} parent=59 // pred_check_branch
          %448 = sbr.rel (%p446) target = $region84
        $region83: #{tpu_custom_call.1} parent=59 // pred_region
          %449 = dma.done [#allocation14], 512
        $region84: #{tpu_custom_call.1} parent=59 // pred_fallthru
          _
        %s450 = sand.u32 %s52, 1
        %s451 = scalar_lea.sflag [#allocation5], %s450
        %s452 = sand.u32 %s52, 1
        %s453 = smul.addr %s452, 8
        %s454 = scalar_lea.vmem [#allocation4], %s453
        %p455 = pneg %p65
        %p456 = pneg %p62
        %s457 = sand.u32 %s32, 1
        %s458 = scalar_lea.sflag [#allocation8], %s457
        %s459 = sand.u32 %s80, 1
        %s460 = smul.addr %s459, 8
        %s461 = scalar_lea.vmem [#allocation7], %s460
        %p462 = pneg %p93
        %p463 = pneg %p90
        %p464 = pneg %p114
        %p465 = pneg %p111
        %p466 = pneg %p135
        %p467 = pneg %p132
        %p468 = pneg %p156
        %p469 = pneg %p153
        %p470 = pneg %p177
        %p471 = pneg %p174
        %p472 = pneg %p198
        %p473 = pneg %p195
        %p474 = pneg %p219
        %p475 = pneg %p216
        %p476 = pneg %p240
        %p477 = pneg %p237
        %p478 = pneg %p261
        %p479 = pneg %p258
        %p480 = pneg %p289
        %p481 = pneg %p286
        %s482 = sand.u32 %s276, 1
        %s483 = scalar_lea.sflag [#allocation6], %s482
        %s484 = sand.u32 %s276, 1
        %s485 = smul.addr %s484, 8
        %s486 = scalar_lea.vmem [#allocation15], %s485
        %v487 = vld [vmem:[%s420] sm:$0xff]
        %v488 = vld [vmem:[#allocation10] sm:$0xff]
        %v489 = vld [vmem:[#allocation10 + $0x8] sm:$0xff]
        %v490 = vld [vmem:[#allocation10 + $0x10] sm:$0xff]
        %v491 = vld [vmem:[#allocation10 + $0x18] sm:$0xff]
        %v492 = vld [vmem:[%s5] sm:$0x1]
        %v494 = vlaneseq
        %v495 = vshrl.u32 %v494, 7
        %v496 = vsub.s32 0, %v495
        %v497 = vrot.slane %v492, %v496
        %vm499 = vcmask 261120
        %v501 = vsel %vm499, %v487, 0
        %503 = vmatprep.subr.mxu0 0.0
        %504 = vmatpush1.msra.mxu0 %v488
        %505 = vmatprep.subr.mxu0 0.0
        %506 = vmatpush1.msra.mxu0 %v489
        %507 = vmatprep.subr.mxu0 0.0
        %508 = vmatpush1.msra.mxu0 %v490
        %509 = vmatprep.subr.mxu0 0.0
        %510 = vmatpush1.msra.mxu0 %v491
        %511 = vmatprep.subr.mxu0 0.0
        %512 = vmatpush1.msra.mxu0 0.0
        %513 = vmatprep.subr.mxu0 0.0
        %514 = vmatpush1.msra.mxu0 0.0
        %515 = vmatprep.subr.mxu0 0.0
        %516 = vmatpush1.msra.mxu0 0.0
        %517 = vmatprep.subr.mxu0 0.0
        %518 = vmatpush1.msra.mxu0 0.0
        %519 = vmatprep.subr.mxu0 0.0
        %520 = vmatpush1.msra.mxu0 0.0
        %521 = vmatprep.subr.mxu0 0.0
        %522 = vmatpush1.msra.mxu0 0.0
        %523 = vmatprep.subr.mxu0 0.0
        %524 = vmatpush1.msra.mxu0 0.0
        %525 = vmatprep.subr.mxu0 0.0
        %526 = vmatpush1.msra.mxu0 0.0
        %527 = vmatprep.subr.mxu0 0.0
        %528 = vmatpush1.msra.mxu0 0.0
        %529 = vmatprep.subr.mxu0 0.0
        %530 = vmatpush1.msra.mxu0 0.0
        %531 = vmatprep.subr.mxu0 0.0
        %532 = vmatpush1.msra.mxu0 0.0
        %533 = vmatprep.subr.mxu0 0.0
        %534 = vmatpush1.msra.mxu0 0.0
        %535 = vmatprep.subr.mxu0 0.0
        %536 = vmatpush1.msra.mxu0 0.0
        %537 = vmatprep.subr.mxu0 0.0
        %538 = vmatpush1.msra.mxu0 0.0
        %539 = vmatprep.subr.mxu0 0.0
        %540 = vmatpush1.msra.mxu0 0.0
        %541 = vmatprep.subr.mxu0 0.0
        %542 = vmatpush1.msra.mxu0 0.0
        %543 = vmatprep.subr.mxu0 0.0
        %544 = vmatpush1.msra.mxu0 0.0
        %545 = vmatprep.subr.mxu0 0.0
        %546 = vmatpush1.msra.mxu0 0.0
        %547 = vmatprep.subr.mxu0 0.0
        %548 = vmatpush1.msra.mxu0 0.0
        %549 = vmatprep.subr.mxu0 0.0
        %550 = vmatpush1.msra.mxu0 0.0
        %551 = vmatprep.subr.mxu0 0.0
        %552 = vmatpush1.msra.mxu0 0.0
        %553 = vmatprep.subr.mxu0 0.0
        %554 = vmatpush1.msra.mxu0 0.0
        %555 = vmatprep.subr.mxu0 0.0
        %556 = vmatpush1.msra.mxu0 0.0
        %557 = vmatprep.subr.mxu0 0.0
        %558 = vmatpush1.msra.mxu0 0.0
        %559 = vmatprep.subr.mxu0 0.0
        %560 = vmatpush1.msra.mxu0 0.0
        %561 = vmatprep.subr.mxu0 0.0
        %562 = vmatpush1.msra.mxu0 0.0
        %563 = vmatprep.subr.mxu0 0.0
        %564 = vmatpush1.msra.mxu0 0.0
        %565 = vmatprep.subr.mxu0 0.0
        %566 = vmatpush1.msra.mxu0 0.0
        %567 = vmatprep.mubr.f32.mxu0 0.0
        %568 = vmatmul.mubr.f32.gmra.mrb[0].mxu0 %v501
        %v569 = vpop.f32.mrb[0].mxu0
        %v570 = vadd.f32 %v497, %v569
        %v571 = vpop.f32.mrb[0].mxu0
        %572 = vdwg.mxu0
        %v573 = vld [vmem:[#allocation12] sm:$0xff]
        %v574 = vld [vmem:[#allocation12 + $0x8] sm:$0xff]
        %v575 = vld [vmem:[#allocation12 + $0x10] sm:$0xff]
        %v576 = vld [vmem:[#allocation12 + $0x18] sm:$0xff]
        %v577 = vld [vmem:[%s7] sm:$0x1]
        %v579 = vlaneseq
        %v580 = vshrl.u32 %v579, 7
        %v581 = vsub.s32 0, %v580
        %v582 = vrot.slane %v577, %v581
        %584 = vmatprep.subr.mxu0 0.0
        %585 = vmatpush1.msra.mxu0 %v573
        %586 = vmatprep.subr.mxu0 0.0
        %587 = vmatpush1.msra.mxu0 %v574
        %588 = vmatprep.subr.mxu0 0.0
        %589 = vmatpush1.msra.mxu0 %v575
        %590 = vmatprep.subr.mxu0 0.0
        %591 = vmatpush1.msra.mxu0 %v576
        %592 = vmatprep.subr.mxu0 0.0
        %593 = vmatpush1.msra.mxu0 0.0
        %594 = vmatprep.subr.mxu0 0.0
        %595 = vmatpush1.msra.mxu0 0.0
        %596 = vmatprep.subr.mxu0 0.0
        %597 = vmatpush1.msra.mxu0 0.0
        %598 = vmatprep.subr.mxu0 0.0
        %599 = vmatpush1.msra.mxu0 0.0
        %600 = vmatprep.subr.mxu0 0.0
        %601 = vmatpush1.msra.mxu0 0.0
        %602 = vmatprep.subr.mxu0 0.0
        %603 = vmatpush1.msra.mxu0 0.0
        %604 = vmatprep.subr.mxu0 0.0
        %605 = vmatpush1.msra.mxu0 0.0
        %606 = vmatprep.subr.mxu0 0.0
        %607 = vmatpush1.msra.mxu0 0.0
        %608 = vmatprep.subr.mxu0 0.0
        %609 = vmatpush1.msra.mxu0 0.0
        %610 = vmatprep.subr.mxu0 0.0
        %611 = vmatpush1.msra.mxu0 0.0
        %612 = vmatprep.subr.mxu0 0.0
        %613 = vmatpush1.msra.mxu0 0.0
        %614 = vmatprep.subr.mxu0 0.0
        %615 = vmatpush1.msra.mxu0 0.0
        %616 = vmatprep.subr.mxu0 0.0
        %617 = vmatpush1.msra.mxu0 0.0
        %618 = vmatprep.subr.mxu0 0.0
        %619 = vmatpush1.msra.mxu0 0.0
        %620 = vmatprep.subr.mxu0 0.0
        %621 = vmatpush1.msra.mxu0 0.0
        %622 = vmatprep.subr.mxu0 0.0
        %623 = vmatpush1.msra.mxu0 0.0
        %624 = vmatprep.subr.mxu0 0.0
        %625 = vmatpush1.msra.mxu0 0.0
        %626 = vmatprep.subr.mxu0 0.0
        %627 = vmatpush1.msra.mxu0 0.0
        %628 = vmatprep.subr.mxu0 0.0
        %629 = vmatpush1.msra.mxu0 0.0
        %630 = vmatprep.subr.mxu0 0.0
        %631 = vmatpush1.msra.mxu0 0.0
        %632 = vmatprep.subr.mxu0 0.0
        %633 = vmatpush1.msra.mxu0 0.0
        %634 = vmatprep.subr.mxu0 0.0
        %635 = vmatpush1.msra.mxu0 0.0
        %636 = vmatprep.subr.mxu0 0.0
        %637 = vmatpush1.msra.mxu0 0.0
        %638 = vmatprep.subr.mxu0 0.0
        %639 = vmatpush1.msra.mxu0 0.0
        %640 = vmatprep.subr.mxu0 0.0
        %641 = vmatpush1.msra.mxu0 0.0
        %642 = vmatprep.subr.mxu0 0.0
        %643 = vmatpush1.msra.mxu0 0.0
        %644 = vmatprep.subr.mxu0 0.0
        %645 = vmatpush1.msra.mxu0 0.0
        %646 = vmatprep.subr.mxu0 0.0
        %647 = vmatpush1.msra.mxu0 0.0
        %648 = vmatprep.mubr.f32.mxu0 0.0
        %649 = vmatmul.mubr.f32.gmra.mrb[0].mxu0 %v501
        %v650 = vpop.f32.mrb[0].mxu0
        %v651 = vadd.f32 %v582, %v650
        %v652 = vpop.f32.mrb[0].mxu0
        %653 = vdwg.mxu0
        %654 = vst.msk [vmem:[#allocation2] sm:$0xff] %vm499, %v570
        %655 = vst.msk [vmem:[#allocation3] sm:$0xff] %vm499, %v651
        %v656 = vld [vmem:[%s429] sm:$0xff]
        %v657 = vld [vmem:[#allocation9] sm:$0xff]
        %v658 = vld [vmem:[#allocation9 + $0x8] sm:$0xff]
        %v659 = vld [vmem:[#allocation9 + $0x10] sm:$0xff]
        %v660 = vld [vmem:[#allocation9 + $0x18] sm:$0xff]
        %v661 = vld [vmem:[%s3] sm:$0x1]
        %v663 = vlaneseq
        %v664 = vshrl.u32 %v663, 7
        %v665 = vsub.s32 0, %v664
        %v666 = vrot.slane %v661, %v665
        %v669 = vsel %vm499, %v656, 0
        %671 = vmatprep.subr.mxu0 0.0
        %672 = vmatpush1.msra.mxu0 %v657
        %673 = vmatprep.subr.mxu0 0.0
        %674 = vmatpush1.msra.mxu0 %v658
        %675 = vmatprep.subr.mxu0 0.0
        %676 = vmatpush1.msra.mxu0 %v659
        %677 = vmatprep.subr.mxu0 0.0
        %678 = vmatpush1.msra.mxu0 %v660
        %679 = vmatprep.subr.mxu0 0.0
        %680 = vmatpush1.msra.mxu0 0.0
        %681 = vmatprep.subr.mxu0 0.0
        %682 = vmatpush1.msra.mxu0 0.0
        %683 = vmatprep.subr.mxu0 0.0
        %684 = vmatpush1.msra.mxu0 0.0
        %685 = vmatprep.subr.mxu0 0.0
        %686 = vmatpush1.msra.mxu0 0.0
        %687 = vmatprep.subr.mxu0 0.0
        %688 = vmatpush1.msra.mxu0 0.0
        %689 = vmatprep.subr.mxu0 0.0
        %690 = vmatpush1.msra.mxu0 0.0
        %691 = vmatprep.subr.mxu0 0.0
        %692 = vmatpush1.msra.mxu0 0.0
        %693 = vmatprep.subr.mxu0 0.0
        %694 = vmatpush1.msra.mxu0 0.0
        %695 = vmatprep.subr.mxu0 0.0
        %696 = vmatpush1.msra.mxu0 0.0
        %697 = vmatprep.subr.mxu0 0.0
        %698 = vmatpush1.msra.mxu0 0.0
        %699 = vmatprep.subr.mxu0 0.0
        %700 = vmatpush1.msra.mxu0 0.0
        %701 = vmatprep.subr.mxu0 0.0
        %702 = vmatpush1.msra.mxu0 0.0
        %703 = vmatprep.subr.mxu0 0.0
        %704 = vmatpush1.msra.mxu0 0.0
        %705 = vmatprep.subr.mxu0 0.0
        %706 = vmatpush1.msra.mxu0 0.0
        %707 = vmatprep.subr.mxu0 0.0
        %708 = vmatpush1.msra.mxu0 0.0
        %709 = vmatprep.subr.mxu0 0.0
        %710 = vmatpush1.msra.mxu0 0.0
        %711 = vmatprep.subr.mxu0 0.0
        %712 = vmatpush1.msra.mxu0 0.0
        %713 = vmatprep.subr.mxu0 0.0
        %714 = vmatpush1.msra.mxu0 0.0
        %715 = vmatprep.subr.mxu0 0.0
        %716 = vmatpush1.msra.mxu0 0.0
        %717 = vmatprep.subr.mxu0 0.0
        %718 = vmatpush1.msra.mxu0 0.0
        %719 = vmatprep.subr.mxu0 0.0
        %720 = vmatpush1.msra.mxu0 0.0
        %721 = vmatprep.subr.mxu0 0.0
        %722 = vmatpush1.msra.mxu0 0.0
        %723 = vmatprep.subr.mxu0 0.0
        %724 = vmatpush1.msra.mxu0 0.0
        %725 = vmatprep.subr.mxu0 0.0
        %726 = vmatpush1.msra.mxu0 0.0
        %727 = vmatprep.subr.mxu0 0.0
        %728 = vmatpush1.msra.mxu0 0.0
        %729 = vmatprep.subr.mxu0 0.0
        %730 = vmatpush1.msra.mxu0 0.0
        %731 = vmatprep.subr.mxu0 0.0
        %732 = vmatpush1.msra.mxu0 0.0
        %733 = vmatprep.subr.mxu0 0.0
        %734 = vmatpush1.msra.mxu0 0.0
        %735 = vmatprep.mubr.f32.mxu0 0.0
        %736 = vmatmul.mubr.f32.gmra.mrb[0].mxu0 %v669
        %v737 = vpop.f32.mrb[0].mxu0
        %v738 = vadd.f32 %v666, %v737
        %v739 = vpop.f32.mrb[0].mxu0
        %740 = vdwg.mxu0
        %v741 = vld [vmem:[#allocation2] sm:$0xff]
        %v743 = vsel %vm499, %v738, 0
        %v746 = vsel %vm499, %v741, 0
        %748 = vmatprep.subr.mxu0 0.0
        %749 = vmatpush1.xpose.msra.mxu0 %v746
        %750 = vmatprep.subr.mxu0 0.0
        %751 = vmatpush1.xpose.msra.mxu0 0.0
        %752 = vmatprep.subr.mxu0 0.0
        %753 = vmatpush1.xpose.msra.mxu0 0.0
        %754 = vmatprep.subr.mxu0 0.0
        %755 = vmatpush1.xpose.msra.mxu0 0.0
        %756 = vmatprep.subr.mxu0 0.0
        %757 = vmatpush1.xpose.msra.mxu0 0.0
        %758 = vmatprep.subr.mxu0 0.0
        %759 = vmatpush1.xpose.msra.mxu0 0.0
        %760 = vmatprep.subr.mxu0 0.0
        %761 = vmatpush1.xpose.msra.mxu0 0.0
        %762 = vmatprep.subr.mxu0 0.0
        %763 = vmatpush1.xpose.msra.mxu0 0.0
        %764 = vmatprep.subr.mxu0 0.0
        %765 = vmatpush1.xpose.msra.mxu0 0.0
        %766 = vmatprep.subr.mxu0 0.0
        %767 = vmatpush1.xpose.msra.mxu0 0.0
        %768 = vmatprep.subr.mxu0 0.0
        %769 = vmatpush1.xpose.msra.mxu0 0.0
        %770 = vmatprep.subr.mxu0 0.0
        %771 = vmatpush1.xpose.msra.mxu0 0.0
        %772 = vmatprep.subr.mxu0 0.0
        %773 = vmatpush1.xpose.msra.mxu0 0.0
        %774 = vmatprep.subr.mxu0 0.0
        %775 = vmatpush1.xpose.msra.mxu0 0.0
        %776 = vmatprep.subr.mxu0 0.0
        %777 = vmatpush1.xpose.msra.mxu0 0.0
        %778 = vmatprep.subr.mxu0 0.0
        %779 = vmatpush1.xpose.msra.mxu0 0.0
        %780 = vmatprep.subr.mxu0 0.0
        %781 = vmatpush1.xpose.msra.mxu0 0.0
        %782 = vmatprep.subr.mxu0 0.0
        %783 = vmatpush1.xpose.msra.mxu0 0.0
        %784 = vmatprep.subr.mxu0 0.0
        %785 = vmatpush1.xpose.msra.mxu0 0.0
        %786 = vmatprep.subr.mxu0 0.0
        %787 = vmatpush1.xpose.msra.mxu0 0.0
        %788 = vmatprep.subr.mxu0 0.0
        %789 = vmatpush1.xpose.msra.mxu0 0.0
        %790 = vmatprep.subr.mxu0 0.0
        %791 = vmatpush1.xpose.msra.mxu0 0.0
        %792 = vmatprep.subr.mxu0 0.0
        %793 = vmatpush1.xpose.msra.mxu0 0.0
        %794 = vmatprep.subr.mxu0 0.0
        %795 = vmatpush1.xpose.msra.mxu0 0.0
        %796 = vmatprep.subr.mxu0 0.0
        %797 = vmatpush1.xpose.msra.mxu0 0.0
        %798 = vmatprep.subr.mxu0 0.0
        %799 = vmatpush1.xpose.msra.mxu0 0.0
        %800 = vmatprep.subr.mxu0 0.0
        %801 = vmatpush1.xpose.msra.mxu0 0.0
        %802 = vmatprep.subr.mxu0 0.0
        %803 = vmatpush1.xpose.msra.mxu0 0.0
        %804 = vmatprep.subr.mxu0 0.0
        %805 = vmatpush1.xpose.msra.mxu0 0.0
        %806 = vmatprep.subr.mxu0 0.0
        %807 = vmatpush1.xpose.msra.mxu0 0.0
        %808 = vmatprep.subr.mxu0 0.0
        %809 = vmatpush1.xpose.msra.mxu0 0.0
        %810 = vmatprep.subr.mxu0 0.0
        %811 = vmatpush1.xpose.msra.mxu0 0.0
        %812 = vmatprep.mubr.f32.mxu0 0.0
        %813 = vmatmul.mubr.f32.gmra.mrb[0].mxu0 %v743
        %v814 = vpop.f32.mrb[0].mxu0
        %v815 = vadd.f32 0.0, %v814
        %v816 = vpop.f32.mrb[0].mxu0
        %817 = vdwg.mxu0
        %vm818 = vcmask 64512
        %v819 = vsel %vm818, %v815, -inf
        %820 = vmax.xlane.f32.xlu0 %v819
        %v821 = vpop.xlane.xlu0 %820
        %v822 = vsub.f32 %v815, %v821
        %v823 = vmul.f32 %v822, 1.442695
        %v824 = vpow.pop %v823
        %v825 = vsel %vm818, %v824, 0.0
        %826 = vadd.xlane.f32.xlu0 %v825
        %v827 = vpop.xlane.xlu0 %826
        %v828 = vld [vmem:[#allocation3] sm:$0xff]
        %v830 = vsel %vm818, %v824, 0
        %832 = vmatprep.subr.mxu0 0.0
        %833 = vmatpush1.msra.mxu0 %v828
        %834 = vmatprep.subr.mxu0 0.0
        %835 = vmatpush1.msra.mxu0 0.0
        %836 = vmatprep.subr.mxu0 0.0
        %837 = vmatpush1.msra.mxu0 0.0
        %838 = vmatprep.subr.mxu0 0.0
        %839 = vmatpush1.msra.mxu0 0.0
        %840 = vmatprep.subr.mxu0 0.0
        %841 = vmatpush1.msra.mxu0 0.0
        %842 = vmatprep.subr.mxu0 0.0
        %843 = vmatpush1.msra.mxu0 0.0
        %844 = vmatprep.subr.mxu0 0.0
        %845 = vmatpush1.msra.mxu0 0.0
        %846 = vmatprep.subr.mxu0 0.0
        %847 = vmatpush1.msra.mxu0 0.0
        %848 = vmatprep.subr.mxu0 0.0
        %849 = vmatpush1.msra.mxu0 0.0
        %850 = vmatprep.subr.mxu0 0.0
        %851 = vmatpush1.msra.mxu0 0.0
        %852 = vmatprep.subr.mxu0 0.0
        %853 = vmatpush1.msra.mxu0 0.0
        %854 = vmatprep.subr.mxu0 0.0
        %855 = vmatpush1.msra.mxu0 0.0
        %856 = vmatprep.subr.mxu0 0.0
        %857 = vmatpush1.msra.mxu0 0.0
        %858 = vmatprep.subr.mxu0 0.0
        %859 = vmatpush1.msra.mxu0 0.0
        %860 = vmatprep.subr.mxu0 0.0
        %861 = vmatpush1.msra.mxu0 0.0
        %862 = vmatprep.subr.mxu0 0.0
        %863 = vmatpush1.msra.mxu0 0.0
        %864 = vmatprep.subr.mxu0 0.0
        %865 = vmatpush1.msra.mxu0 0.0
        %866 = vmatprep.subr.mxu0 0.0
        %867 = vmatpush1.msra.mxu0 0.0
        %868 = vmatprep.subr.mxu0 0.0
        %869 = vmatpush1.msra.mxu0 0.0
        %870 = vmatprep.subr.mxu0 0.0
        %871 = vmatpush1.msra.mxu0 0.0
        %872 = vmatprep.subr.mxu0 0.0
        %873 = vmatpush1.msra.mxu0 0.0
        %874 = vmatprep.subr.mxu0 0.0
        %875 = vmatpush1.msra.mxu0 0.0
        %876 = vmatprep.subr.mxu0 0.0
        %877 = vmatpush1.msra.mxu0 0.0
        %878 = vmatprep.subr.mxu0 0.0
        %879 = vmatpush1.msra.mxu0 0.0
        %880 = vmatprep.subr.mxu0 0.0
        %881 = vmatpush1.msra.mxu0 0.0
        %882 = vmatprep.subr.mxu0 0.0
        %883 = vmatpush1.msra.mxu0 0.0
        %884 = vmatprep.subr.mxu0 0.0
        %885 = vmatpush1.msra.mxu0 0.0
        %886 = vmatprep.subr.mxu0 0.0
        %887 = vmatpush1.msra.mxu0 0.0
        %888 = vmatprep.subr.mxu0 0.0
        %889 = vmatpush1.msra.mxu0 0.0
        %890 = vmatprep.subr.mxu0 0.0
        %891 = vmatpush1.msra.mxu0 0.0
        %892 = vmatprep.subr.mxu0 0.0
        %893 = vmatpush1.msra.mxu0 0.0
        %894 = vmatprep.subr.mxu0 0.0
        %895 = vmatpush1.msra.mxu0 0.0
        %896 = vmatprep.mubr.f32.mxu0 0.0
        %897 = vmatmul.mubr.f32.gmra.mrb[0].mxu0 %v830
        %v898 = vpop.f32.mrb[0].mxu0
        %v899 = vadd.f32 0.0, %v898
        %v900 = vpop.f32.mrb[0].mxu0
        %901 = vdwg.mxu0
        %v902 = vrcp.pop %v827
        %v903 = vmul.f32 %v899, %v902
        %v904 = vld [vmem:[#allocation13] sm:$0xff]
        %v905 = vld [vmem:[#allocation13 + $0x8] sm:$0xff]
        %v906 = vld [vmem:[#allocation13 + $0x10] sm:$0xff]
        %v907 = vld [vmem:[#allocation13 + $0x18] sm:$0xff]
        %v908 = vld [vmem:[%s9] sm:$0x1]
        %v910 = vlaneseq
        %v911 = vshrl.u32 %v910, 7
        %v912 = vsub.s32 0, %v911
        %v913 = vrot.slane %v908, %v912
        %v916 = vsel %vm499, %v903, 0
        %918 = vmatprep.subr.mxu0 0.0
        %919 = vmatpush1.msra.mxu0 %v904
        %920 = vmatprep.subr.mxu0 0.0
        %921 = vmatpush1.msra.mxu0 %v905
        %922 = vmatprep.subr.mxu0 0.0
        %923 = vmatpush1.msra.mxu0 %v906
        %924 = vmatprep.subr.mxu0 0.0
        %925 = vmatpush1.msra.mxu0 %v907
        %926 = vmatprep.subr.mxu0 0.0
        %927 = vmatpush1.msra.mxu0 0.0
        %928 = vmatprep.subr.mxu0 0.0
        %929 = vmatpush1.msra.mxu0 0.0
        %930 = vmatprep.subr.mxu0 0.0
        %931 = vmatpush1.msra.mxu0 0.0
        %932 = vmatprep.subr.mxu0 0.0
        %933 = vmatpush1.msra.mxu0 0.0
        %934 = vmatprep.subr.mxu0 0.0
        %935 = vmatpush1.msra.mxu0 0.0
        %936 = vmatprep.subr.mxu0 0.0
        %937 = vmatpush1.msra.mxu0 0.0
        %938 = vmatprep.subr.mxu0 0.0
        %939 = vmatpush1.msra.mxu0 0.0
        %940 = vmatprep.subr.mxu0 0.0
        %941 = vmatpush1.msra.mxu0 0.0
        %942 = vmatprep.subr.mxu0 0.0
        %943 = vmatpush1.msra.mxu0 0.0
        %944 = vmatprep.subr.mxu0 0.0
        %945 = vmatpush1.msra.mxu0 0.0
        %946 = vmatprep.subr.mxu0 0.0
        %947 = vmatpush1.msra.mxu0 0.0
        %948 = vmatprep.subr.mxu0 0.0
        %949 = vmatpush1.msra.mxu0 0.0
        %950 = vmatprep.subr.mxu0 0.0
        %951 = vmatpush1.msra.mxu0 0.0
        %952 = vmatprep.subr.mxu0 0.0
        %953 = vmatpush1.msra.mxu0 0.0
        %954 = vmatprep.subr.mxu0 0.0
        %955 = vmatpush1.msra.mxu0 0.0
        %956 = vmatprep.subr.mxu0 0.0
        %957 = vmatpush1.msra.mxu0 0.0
        %958 = vmatprep.subr.mxu0 0.0
        %959 = vmatpush1.msra.mxu0 0.0
        %960 = vmatprep.subr.mxu0 0.0
        %961 = vmatpush1.msra.mxu0 0.0
        %962 = vmatprep.subr.mxu0 0.0
        %963 = vmatpush1.msra.mxu0 0.0
        %964 = vmatprep.subr.mxu0 0.0
        %965 = vmatpush1.msra.mxu0 0.0
        %966 = vmatprep.subr.mxu0 0.0
        %967 = vmatpush1.msra.mxu0 0.0
        %968 = vmatprep.subr.mxu0 0.0
        %969 = vmatpush1.msra.mxu0 0.0
        %970 = vmatprep.subr.mxu0 0.0
        %971 = vmatpush1.msra.mxu0 0.0
        %972 = vmatprep.subr.mxu0 0.0
        %973 = vmatpush1.msra.mxu0 0.0
        %974 = vmatprep.subr.mxu0 0.0
        %975 = vmatpush1.msra.mxu0 0.0
        %976 = vmatprep.subr.mxu0 0.0
        %977 = vmatpush1.msra.mxu0 0.0
        %978 = vmatprep.subr.mxu0 0.0
        %979 = vmatpush1.msra.mxu0 0.0
        %980 = vmatprep.subr.mxu0 0.0
        %981 = vmatpush1.msra.mxu0 0.0
        %982 = vmatprep.mubr.f32.mxu0 0.0
        %983 = vmatmul.mubr.f32.gmra.mrb[0].mxu0 %v916
        %v984 = vpop.f32.mrb[0].mxu0
        %v985 = vadd.f32 %v913, %v984
        %v986 = vpop.f32.mrb[0].mxu0
        %987 = vdwg.mxu0
        %v988 = vadd.f32 %v985, %v656
        %989 = vst.msk [vmem:[%s486] sm:$0xff] %vm499, %v988
        %s990 = sand.u32 %s276, 1
        %s991 = scalar_lea.sflag [#allocation6], %s990
        %s992 = sand.u32 %s276, 1
        %s993 = smul.addr %s992, 8
        %s994 = scalar_lea.vmem [#allocation15], %s993
        // Predicated region
        $region85: #{tpu_custom_call.1} parent=59 // pred_check
          %p995 = pneg %p286
        $region86: #{tpu_custom_call.1} parent=59 // pred_check_branch
          %997 = sbr.rel (%p995) target = $region88
        $region87: #{tpu_custom_call.1} parent=59 // pred_region
          %s999 = ssub.s32 128, 128
          %1000 = vsyncadd %s991, %s999
          %s1001 = sadd.s32 %s37, %s36
          %s1002 = smul.addr %s1001, 128
          %s1003 = scalar_lea.hbm %s10, %s1002
          %s1005 = sshll.u32 %s994, 4
          %s1006 = int_to_ptr.vmem [resolvable:$true] %s1005
          %1008 = dma.vmem_to_hbm [thread:$0]  %s1006, 128, %s1003, %s991
        $region88: #{tpu_custom_call.1} parent=59 // pred_fallthru
          _
      $region60: #{tpu_custom_call.1} parent=5 // pred_fallthru
        _
      %p1009 = scmp.le.s32.totalorder 2, %s27
      // Predicated region
      $region89: #{tpu_custom_call.1} parent=5 // pred_check
        %p1010 = pneg %p1009
      $region90: #{tpu_custom_call.1} parent=5 // pred_check_branch
        %1012 = sbr.rel (%p1010) target = $region92
      $region91: #{tpu_custom_call.1} parent=5 // pred_region
        %s1013 = ssub.s32 %s27, 2
        // Predicated region
        $region93: #{tpu_custom_call.1} parent=91 // pred_check
          %p1014 = pneg %p292
        $region94: #{tpu_custom_call.1} parent=91 // pred_check_branch
          %1016 = sbr.rel (%p1014) target = $region96
        $region95: #{tpu_custom_call.1} parent=91 // pred_region
          %s1017 = sand.u32 %s277, 1
          %s1018 = scalar_lea.sflag [#allocation6], %s1017
          %s1019 = sand.u32 %s277, 1
          %s1020 = smul.addr %s1019, 8
          %s1021 = scalar_lea.vmem [#allocation15], %s1020
          %1022 = dma.done %s1018, 128
        $region96: #{tpu_custom_call.1} parent=91 // pred_fallthru
          _
      $region92: #{tpu_custom_call.1} parent=5 // pred_fallthru
        _
    $region6: #{tpu_custom_call.1} parent=1 // loop_footer
      %s31 = sadd.s32 1, %s27
    $region7: #{tpu_custom_call.1} parent=1 // loop_footer_branch
      %26 = sbr.rel target = $region3
    $region8: #{tpu_custom_call.1} parent=1 // loop_exit
      _
    %1023 = vsyncpa [#allocation5], 1
    %s1024 = scalar_lea.sflag [#allocation5], 1
    %1025 = vsyncpa %s1024, 1
    %1026 = vsyncpa [#allocation8], 1
    %s1027 = scalar_lea.sflag [#allocation8], 1
    %1028 = vsyncpa %s1027, 1
    %1029 = vsyncpa [#allocation11], 1
    %1030 = vsyncpa [#allocation14], 1
    %1031 = vsyncpa [#allocation6], 1
    %s1032 = scalar_lea.sflag [#allocation6], 1
    %1033 = vsyncpa %s1032, 1

</llo_original>
